<compile_context>
chip_gen: v7x
topology: tpu7x:2x2x1
jax: 0.10.0
libtpu: 0.0.40
codegen_flags: <defaults>
</compile_context>

<pallas_src>
import math
from functools import partial

import numpy as np
import jax
import jax.numpy as jnp
from jax.experimental import pallas as pl
from jax.experimental.pallas import tpu as pltpu

LN_EPS = 1e-5


def _round_up(v, m):
    return (v + m - 1) // m * m


def _layernorm(x, gamma, beta, true_dim):
    # One-pass LN over the lane-padded channel axis. Padded channels of x are exactly
    # zero, so sums over the padded axis equal sums over the true channels; divide by
    # the true channel count. (Padded gamma/beta are zero -> padded lanes stay zero.)
    inv_d = 1.0 / true_dim
    mu = jnp.sum(x, axis=-1, keepdims=True) * inv_d
    var = jnp.maximum(jnp.sum(x * x, axis=-1, keepdims=True) * inv_d - mu * mu, 0.0)
    return (x - mu) * jax.lax.rsqrt(var + LN_EPS) * gamma + beta


def _gelu(x):
    # tanh-approximate GELU (goes to the EUP slot on v6e/v7x); gelu(0) == 0 exactly,
    # so padded lanes stay zero.
    c = math.sqrt(2.0 / math.pi)
    return 0.5 * x * (1.0 + jnp.tanh(c * (x + 0.044715 * x * x * x)))


def mixer_kernel(b_tile, seq, d_true,
                 x_ref, w_in_ref, b_in_ref,
                 ln_ref, wt1_ref, wt2_ref, bt_ref,
                 wc1_ref, bc1_ref, wc2_ref,
                 lnfg_ref, lnfb_ref, w_out_ref, b_out_ref,
                 o_ref, h_ref):
    layer = pl.program_id(1)
    last = pl.num_programs(1) - 1
    sef = wt1_ref.shape[1]                                       # S * expansion_factor
    cin_p = x_ref.shape[-1]

    # ---- layer 0: input projection Linear(input_dim -> hidden_dim) ---------------
    @pl.when(layer == 0)
    def _init():
        xb = x_ref[...].reshape(b_tile * seq, cin_p)             # bf16, one matmul
        h_ref[...] = (jnp.dot(xb, w_in_ref[...],
                              preferred_element_type=jnp.float32) + b_in_ref[...])

    # ---- unpack the packed per-layer small params ---------------------------------
    lnp = ln_ref[0]                                              # (5, D_p) f32
    ln1_g, ln1_b = lnp[0:1, :], lnp[1:2, :]
    ln2_g, ln2_b = lnp[2:3, :], lnp[3:4, :]
    bc2 = lnp[4:5, :]
    btp = bt_ref[0]                                              # (S*ef + S, D_p) f32
    bt1 = btp[0:sef, :]                                          # (S*ef, D_p), pad lanes 0
    bt2 = btp[sef:sef + seq, :]                                  # (S,    D_p), pad lanes 0

    # ---- token-mixing MLP: PreNormResidual(FeedForward(S, Conv1d k=1)) -----------
    wt1 = wt1_ref[0]                                             # (S*ef, S)  bf16
    wt2 = wt2_ref[0]                                             # (S, S*ef)  bf16
    h = h_ref[...]                                               # (b_tile*S, D_p) f32
    xn = _layernorm(h, ln1_g, ln1_b, d_true).astype(jnp.bfloat16)
    # token-mix FLOPs are ~S/D of channel-mix; per-b K=S matmuls are acceptable here
    for b in range(b_tile):
        xb = xn[b * seq:(b + 1) * seq, :]                        # (S, D_p) bf16
        u = jnp.dot(wt1, xb, preferred_element_type=jnp.float32) + bt1
        u = _gelu(u).astype(jnp.bfloat16)                        # (S*ef, D_p)
        v = jnp.dot(wt2, u, preferred_element_type=jnp.float32) + bt2
        h_ref[b * seq:(b + 1) * seq, :] = h[b * seq:(b + 1) * seq, :] + v

    # ---- channel-mixing MLP: PreNormResidual(FeedForward(D, Linear)) -------------
    h = h_ref[...]
    xn = _layernorm(h, ln2_g, ln2_b, d_true).astype(jnp.bfloat16)
    c = jnp.dot(xn, wc1_ref[0], preferred_element_type=jnp.float32) + bc1_ref[0]
    c = _gelu(c).astype(jnp.bfloat16)                            # (b_tile*S, Def_p)
    c = jnp.dot(c, wc2_ref[0], preferred_element_type=jnp.float32) + bc2
    h_ref[...] = h + c                                           # padded channels stay 0

    # ---- last layer: final LayerNorm, mean over tokens, output projection --------
    @pl.when(layer == last)
    def _final():
        hn = _layernorm(h_ref[...], lnfg_ref[...], lnfb_ref[...], d_true)
        inv_s = 1.0 / seq
        rows = [jnp.sum(hn[b * seq:(b + 1) * seq, :], axis=0, keepdims=True)
                for b in range(b_tile)]
        pooled = (jnp.concatenate(rows, axis=0) if b_tile > 1 else rows[0]) * inv_s
        out = (jnp.dot(pooled.astype(jnp.bfloat16), w_out_ref[...],
                       preferred_element_type=jnp.float32) + b_out_ref[...])
        o_ref[...] = out[None]                                   # single unmasked store


def _vmem_estimate(bt, S, cin_p, d_p, sef, def_p, dout_p):
    """Rough per-grid-step VMEM bytes (double-buffered blocks + scratch + temps)."""
    per_layer = 2 * (2 * sef * S * 2                      # wt1 + wt2 (bf16)
                     + 2 * d_p * def_p * 2                # wc1 + wc2 (bf16)
                     + (sef + S) * d_p * 4                # bt_pack (f32)
                     + 5 * d_p * 4                        # ln_pack (f32)
                     + def_p * 4)                         # bc1 (f32)
    const = 2 * (cin_p * d_p * 2 + d_p * dout_p * 2 + (3 * d_p + dout_p) * 4)
    act = (2 * bt * S * cin_p * 2                         # x block (bf16, dbl buf)
           + bt * S * d_p * 4                             # h scratch (f32)
           + 2 * bt * dout_p * 4                          # out block
           + bt * S * (2 * d_p + 6 * def_p))              # xn bf16 + GELU temps
    return per_layer + const + act


def mlp_mixer_forward(x, params, depth, *, b_tile=None):
    """Fused MLP-Mixer forward. x: (B, S, input_dim) f32 -> (B, output_dim) f32."""
    B, S, Cin = x.shape
    D = params["w_in"].shape[1]
    Sef = params["wt1"].shape[1]
    Def = params["wc1"].shape[2]
    Dout = params["w_out"].shape[1]

    cin_p, d_p = _round_up(Cin, 128), _round_up(D, 128)
    def_p, dout_p = _round_up(Def, 128), _round_up(Dout, 128)

    try:
        vmem_cap = int(pltpu.get_tpu_info().vmem_capacity_bytes)
    except Exception:                                     # fallback: v7x 64 MiB/TC
        vmem_cap = 64 << 20
    vmem_budget = int(0.55 * vmem_cap)

    if b_tile is None:
        # Aim for channel-mix M = b_tile*S >= 256 (fills the 256-wide MXU on v6e/v7x)
        b_tile = max(1, min(B, -(-256 // S)))
        if B >= 2:                                        # keep >=2 batch tiles (v7x megacore)
            b_tile = min(b_tile, max(1, B // 2))
        while b_tile > 1 and _vmem_estimate(b_tile, S, cin_p, d_p, Sef, def_p,
                                            dout_p) > vmem_budget:
            b_tile -= 1
    b_tile = max(1, b_tile)

    b_pad = _round_up(B, b_tile)
    num_bt = b_pad // b_tile

    def pad(a, shape, dtype=None):
        a = jnp.pad(a, [(0, t - s) for s, t in zip(a.shape, shape)])
        return a if dtype is None else a.astype(dtype)

    def pad_last(a, n):
        return jnp.pad(a, [(0, 0)] * (a.ndim - 1) + [(0, n - a.shape[-1])])

    bf16 = jnp.bfloat16

    # small per-layer params packed: rows = [ln1_g, ln1_b, ln2_g, ln2_b, bc2]
    ln_pack = jnp.concatenate(
        [pad_last(params["ln1_g"], d_p), pad_last(params["ln1_b"], d_p),
         pad_last(params["ln2_g"], d_p), pad_last(params["ln2_b"], d_p),
         pad_last(params["bc2"], d_p)], axis=1)                        # (depth, 5, D_p)

    # token-mix biases expanded to full lane width, zero in padded lanes
    lane_mask = (jnp.arange(d_p) < D).astype(jnp.float32)              # (D_p,)
    bt1_full = params["bt1"][:, 0, :, None] * lane_mask[None, None, :]  # (depth, S*ef, D_p)
    bt2_full = params["bt2"][:, 0, :, None] * lane_mask[None, None, :]  # (depth, S,    D_p)
    bt_pack = jnp.concatenate([bt1_full, bt2_full], axis=1)            # (depth, S*ef+S, D_p)

    args = (
        pad(x, (b_pad, S, cin_p), bf16),                               # x (bf16)
        pad(params["w_in"], (cin_p, d_p), bf16),                       # w_in
        pad(params["b_in"], (1, d_p)),                                 # b_in
        ln_pack,                                                       # packed LN/bc2
        params["wt1"].astype(bf16),                                    # (depth, S*ef, S)
        params["wt2"].astype(bf16),                                    # (depth, S, S*ef)
        bt_pack,                                                       # packed bt1/bt2
        pad(params["wc1"], (depth, d_p, def_p), bf16),
        pad(params["bc1"], (depth, 1, def_p)),
        pad(params["wc2"], (depth, def_p, d_p), bf16),
        pad(params["lnf_g"], (1, d_p)),
        pad(params["lnf_b"], (1, d_p)),
        pad(params["w_out"], (d_p, dout_p), bf16),
        pad(params["b_out"], (1, dout_p)),
    )

    def layer_spec(a):        # per-layer stacked params, indexed by the depth grid axis
        return pl.BlockSpec((1,) + a.shape[1:], lambda bt, l: (l, 0, 0))

    def const_spec(a):        # small weights resident for the whole grid
        nd = a.ndim
        return pl.BlockSpec(a.shape, lambda bt, l, _n=nd: (0,) * _n)

    in_specs = [
        pl.BlockSpec((b_tile, S, cin_p), lambda bt, l: (bt, 0, 0)),    # x
        const_spec(args[1]), const_spec(args[2]),                      # w_in, b_in
        layer_spec(args[3]),                                           # ln_pack
        layer_spec(args[4]), layer_spec(args[5]), layer_spec(args[6]), # wt1, wt2, bt_pack
        layer_spec(args[7]), layer_spec(args[8]), layer_spec(args[9]), # wc1, bc1, wc2
        const_spec(args[10]), const_spec(args[11]),                    # lnf g/b
        const_spec(args[12]), const_spec(args[13]),                    # w_out, b_out
    ]

    flops = int(2 * b_pad * (S * cin_p * d_p
                             + depth * (2 * Sef * S * d_p
                                        + S * d_p * def_p + S * def_p * d_p)
                             + d_p * dout_p))
    transcendentals = int(b_pad * depth * (Sef * d_p + S * def_p))
    per_layer_bytes = sum(int(a.size) * a.dtype.itemsize for a in args[3:10])
    const_bytes = sum(int(a.size) * a.dtype.itemsize
                      for a in (args[1], args[2]) + args[10:])
    bytes_accessed = int(args[0].size * args[0].dtype.itemsize
                         + num_bt * per_layer_bytes                    # re-streamed per tile
                         + const_bytes
                         + num_bt * b_tile * dout_p * 4)

    out = pl.pallas_call(
        partial(mixer_kernel, b_tile, S, D),
        out_shape=jax.ShapeDtypeStruct((num_bt, b_tile, dout_p), jnp.float32),
        grid=(num_bt, depth),
        in_specs=in_specs,
        out_specs=pl.BlockSpec((1, b_tile, dout_p), lambda bt, l: (bt, 0, 0)),
        scratch_shapes=[pltpu.VMEM((b_tile * S, d_p), jnp.float32)],
        compiler_params=pltpu.CompilerParams(
            dimension_semantics=("parallel", "arbitrary"),
            vmem_limit_bytes=int(0.9 * vmem_cap)),
        cost_estimate=pl.CostEstimate(flops=flops,
                                      transcendentals=transcendentals,
                                      bytes_accessed=bytes_accessed),
    )(*args)
    return out.reshape(b_pad, dout_p)[:B, :Dout]


def init_params(key, S, input_dim, hidden_dim, output_dim, depth, ef):
    keys = iter(jax.random.split(key, 16 + 16 * depth))

    def lin(kin, kout):
        s = 1.0 / math.sqrt(kin)
        w = jax.random.uniform(next(keys), (kin, kout), jnp.float32, -s, s)
        b = jax.random.uniform(next(keys), (1, kout), jnp.float32, -s, s)
        return w, b

    def conv(kin, kout):  # Conv1d k=1 stored as (out, in)
        s = 1.0 / math.sqrt(kin)
        w = jax.random.uniform(next(keys), (kout, kin), jnp.float32, -s, s)
        b = jax.random.uniform(next(keys), (1, kout), jnp.float32, -s, s)
        return w, b

    w_in, b_in = lin(input_dim, hidden_dim)
    ln1_g, ln1_b, wt1, bt1, wt2, bt2 = [], [], [], [], [], []
    ln2_g, ln2_b, wc1, bc1, wc2, bc2 = [], [], [], [], [], []
    for _ in range(depth):
        ln1_g.append(jnp.ones((1, hidden_dim), jnp.float32))
        ln1_b.append(jnp.zeros((1, hidden_dim), jnp.float32))
        w, b = conv(S, S * ef); wt1.append(w); bt1.append(b)
        w, b = conv(S * ef, S); wt2.append(w); bt2.append(b)
        ln2_g.append(jnp.ones((1, hidden_dim), jnp.float32))
        ln2_b.append(jnp.zeros((1, hidden_dim), jnp.float32))
        w, b = lin(hidden_dim, hidden_dim * ef); wc1.append(w); bc1.append(b)
        w, b = lin(hidden_dim * ef, hidden_dim); wc2.append(w); bc2.append(b)
    w_out, b_out = lin(hidden_dim, output_dim)

    stk = lambda xs: jnp.stack(xs, axis=0)
    return dict(
        w_in=w_in, b_in=b_in,
        ln1_g=stk(ln1_g), ln1_b=stk(ln1_b),
        wt1=stk(wt1), bt1=stk(bt1), wt2=stk(wt2), bt2=stk(bt2),
        ln2_g=stk(ln2_g), ln2_b=stk(ln2_b),
        wc1=stk(wc1), bc1=stk(bc1), wc2=stk(wc2), bc2=stk(bc2),
        lnf_g=jnp.ones((1, hidden_dim), jnp.float32),
        lnf_b=jnp.zeros((1, hidden_dim), jnp.float32),
        w_out=w_out, b_out=b_out,
    )


def reference_forward(x, params, depth):
    def ln(v, g, b):
        mu = jnp.mean(v, axis=-1, keepdims=True)
        var = jnp.mean((v - mu) ** 2, axis=-1, keepdims=True)
        return (v - mu) * jax.lax.rsqrt(var + LN_EPS) * g + b

    gelu = lambda v: jax.nn.gelu(v, approximate=False)
    h = x @ params["w_in"] + params["b_in"]
    for l in range(depth):
        xn = ln(h, params["ln1_g"][l], params["ln1_b"][l])
        t = jnp.einsum("os,bsd->bod", params["wt1"][l], xn) + params["bt1"][l][0][None, :, None]
        t = gelu(t)
        t = jnp.einsum("so,bod->bsd", params["wt2"][l], t) + params["bt2"][l][0][None, :, None]
        h = h + t
        xn = ln(h, params["ln2_g"][l], params["ln2_b"][l])
        c = gelu(xn @ params["wc1"][l] + params["bc1"][l]) @ params["wc2"][l] + params["bc2"][l]
        h = h + c
    hn = ln(h, params["lnf_g"], params["lnf_b"])
    pooled = jnp.mean(hn, axis=1)
    return pooled @ params["w_out"] + params["b_out"][0]


if __name__ == "__main__":
    B, S, input_dim, hidden_dim, output_dim, depth, ef = 2, 8, 4, 32, 16, 2, 4
    key = jax.random.PRNGKey(0)
    kx, kp = jax.random.split(key)
    x = jax.random.normal(kx, (B, S, input_dim), jnp.float32)
    params = init_params(kp, S, input_dim, hidden_dim, output_dim, depth, ef)

    ref = jax.block_until_ready(reference_forward(x, params, depth))

    # auto b_tile (keeps >=2 batch tiles for the two v7x TCs) and explicit b_tile=2
    # (exercises batch folding into the matmul M dimension).
    for bt in (None, 1, 2):
        out = jax.block_until_ready(mlp_mixer_forward(x, params, depth, b_tile=bt))
        assert out.shape == (B, output_dim)
        np.testing.assert_allclose(np.asarray(out), np.asarray(ref),
                                   rtol=2e-2, atol=2e-2)
    print("KERNEL_OK")
</pallas_src>

<mosaic_0001>
module attributes {stable_mosaic.version = 11 : i64} {
  func.func @mixer_kernel(%arg0: i32, %arg1: i32, %arg2: memref<1x8x128xbf16, #tpu.memory_space<vmem>>, %arg3: memref<128x128xbf16, #tpu.memory_space<vmem>>, %arg4: memref<1x128xf32, #tpu.memory_space<vmem>>, %arg5: memref<1x5x128xf32, #tpu.memory_space<vmem>>, %arg6: memref<1x32x8xbf16, #tpu.memory_space<vmem>>, %arg7: memref<1x8x32xbf16, #tpu.memory_space<vmem>>, %arg8: memref<1x40x128xf32, #tpu.memory_space<vmem>>, %arg9: memref<1x128x128xbf16, #tpu.memory_space<vmem>>, %arg10: memref<1x1x128xf32, #tpu.memory_space<vmem>>, %arg11: memref<1x128x128xbf16, #tpu.memory_space<vmem>>, %arg12: memref<1x128xf32, #tpu.memory_space<vmem>>, %arg13: memref<1x128xf32, #tpu.memory_space<vmem>>, %arg14: memref<128x128xbf16, #tpu.memory_space<vmem>>, %arg15: memref<1x128xf32, #tpu.memory_space<vmem>>, %arg16: memref<1x1x128xf32, #tpu.memory_space<vmem>>, %arg17: memref<8x128xf32, #tpu.memory_space<vmem>>) attributes {dimension_semantics = [#tpu.dimension_semantics<parallel>, #tpu.dimension_semantics<arbitrary>], iteration_bounds = array<i64: 2, 2>, scalar_prefetch = 0 : i64, scratch_operands = 1 : i64, tpu.core_type = #tpu.core_type<tc>, window_params = [{transform_indices = @transform_0, window_bounds = array<i64: 1, 8, 128>}, {pipeline_mode = #tpu.pipeline_mode<synchronous>, transform_indices = @transform_1, window_bounds = array<i64: 128, 128>}, {pipeline_mode = #tpu.pipeline_mode<synchronous>, transform_indices = @transform_2, window_bounds = array<i64: 1, 128>}, {transform_indices = @transform_3, window_bounds = array<i64: 1, 5, 128>}, {transform_indices = @transform_4, window_bounds = array<i64: 1, 32, 8>}, {transform_indices = @transform_5, window_bounds = array<i64: 1, 8, 32>}, {transform_indices = @transform_6, window_bounds = array<i64: 1, 40, 128>}, {transform_indices = @transform_7, window_bounds = array<i64: 1, 128, 128>}, {transform_indices = @transform_8, window_bounds = array<i64: 1, 1, 128>}, {transform_indices = @transform_9, window_bounds = array<i64: 1, 128, 128>}, {pipeline_mode = #tpu.pipeline_mode<synchronous>, transform_indices = @transform_10, window_bounds = array<i64: 1, 128>}, {pipeline_mode = #tpu.pipeline_mode<synchronous>, transform_indices = @transform_11, window_bounds = array<i64: 1, 128>}, {pipeline_mode = #tpu.pipeline_mode<synchronous>, transform_indices = @transform_12, window_bounds = array<i64: 128, 128>}, {pipeline_mode = #tpu.pipeline_mode<synchronous>, transform_indices = @transform_13, window_bounds = array<i64: 1, 128>}, {transform_indices = @transform_14, window_bounds = array<i64: 1, 1, 128>}]} {
    %c0_i32 = arith.constant 0 : i32
    %0 = arith.cmpi eq, %arg1, %c0_i32 : i32
    %1 = arith.extui %0 : i1 to i32
    %c0_i32_0 = arith.constant 0 : i32
    %2 = arith.cmpi ne, %1, %c0_i32_0 : i32
    scf.if %2 {
      %c0_53 = arith.constant 0 : index
      %c0_54 = arith.constant 0 : index
      %c0_55 = arith.constant 0 : index
      %121 = vector.load %arg2[%c0_53, %c0_54, %c0_55] : memref<1x8x128xbf16, #tpu.memory_space<vmem>>, vector<1x8x128xbf16>
      %122 = vector.shape_cast %121 : vector<1x8x128xbf16> to vector<8x128xbf16>
      %c0_56 = arith.constant 0 : index
      %c0_57 = arith.constant 0 : index
      %123 = vector.load %arg3[%c0_56, %c0_57] : memref<128x128xbf16, #tpu.memory_space<vmem>>, vector<128x128xbf16>
      %cst_58 = arith.constant dense<0.000000e+00> : vector<8x128xf32>
      %124 = tpu.matmul %122, %123, %cst_58 {dimension_numbers = #tpu.dot_dimension_numbers<[1], [0], [0], [1], [0, 0, 1, 1], [], []>} : vector<8x128xbf16>, vector<128x128xbf16>, vector<8x128xf32> -> vector<8x128xf32>
      %c0_59 = arith.constant 0 : index
      %c0_60 = arith.constant 0 : index
      %125 = vector.load %arg4[%c0_59, %c0_60] : memref<1x128xf32, #tpu.memory_space<vmem>>, vector<1x128xf32>
      %126 = vector.broadcast %125 : vector<1x128xf32> to vector<8x128xf32>
      %127 = arith.addf %124, %126 : vector<8x128xf32>
      %c0_61 = arith.constant 0 : index
      %c0_62 = arith.constant 0 : index
      %128 = vector.load %arg17[%c0_61, %c0_62] : memref<8x128xf32, #tpu.memory_space<vmem>>, vector<8x128xf32>
      tpu.vector_store %arg17[%c0_61, %c0_62], %127 {strides = array<i32>} : memref<8x128xf32, #tpu.memory_space<vmem>>, vector<8x128xf32>,
    } else {
    }
    %c0 = arith.constant 0 : index
    %c0_1 = arith.constant 0 : index
    %c0_2 = arith.constant 0 : index
    %3 = vector.load %arg5[%c0, %c0_1, %c0_2] : memref<1x5x128xf32, #tpu.memory_space<vmem>>, vector<1x5x128xf32>
    %4 = vector.shape_cast %3 : vector<1x5x128xf32> to vector<5x128xf32>
    %5 = vector.extract_strided_slice %4 {offsets = [0, 0], sizes = [1, 128], strides = [1, 1]} : vector<5x128xf32> to vector<1x128xf32>
    %6 = vector.extract_strided_slice %4 {offsets = [1, 0], sizes = [1, 128], strides = [1, 1]} : vector<5x128xf32> to vector<1x128xf32>
    %7 = vector.extract_strided_slice %4 {offsets = [2, 0], sizes = [1, 128], strides = [1, 1]} : vector<5x128xf32> to vector<1x128xf32>
    %8 = vector.extract_strided_slice %4 {offsets = [3, 0], sizes = [1, 128], strides = [1, 1]} : vector<5x128xf32> to vector<1x128xf32>
    %9 = vector.extract_strided_slice %4 {offsets = [4, 0], sizes = [1, 128], strides = [1, 1]} : vector<5x128xf32> to vector<1x128xf32>
    %c0_3 = arith.constant 0 : index
    %c0_4 = arith.constant 0 : index
    %c0_5 = arith.constant 0 : index
    %10 = vector.load %arg8[%c0_3, %c0_4, %c0_5] : memref<1x40x128xf32, #tpu.memory_space<vmem>>, vector<1x40x128xf32>
    %11 = vector.shape_cast %10 : vector<1x40x128xf32> to vector<40x128xf32>
    %12 = vector.extract_strided_slice %11 {offsets = [0, 0], sizes = [32, 128], strides = [1, 1]} : vector<40x128xf32> to vector<32x128xf32>
    %13 = vector.extract_strided_slice %11 {offsets = [32, 0], sizes = [8, 128], strides = [1, 1]} : vector<40x128xf32> to vector<8x128xf32>
    %c0_6 = arith.constant 0 : index
    %c0_7 = arith.constant 0 : index
    %c0_8 = arith.constant 0 : index
    %14 = vector.load %arg6[%c0_6, %c0_7, %c0_8] : memref<1x32x8xbf16, #tpu.memory_space<vmem>>, vector<1x32x8xbf16>
    %15 = vector.shape_cast %14 : vector<1x32x8xbf16> to vector<32x8xbf16>
    %c0_9 = arith.constant 0 : index
    %c0_10 = arith.constant 0 : index
    %c0_11 = arith.constant 0 : index
    %16 = vector.load %arg7[%c0_9, %c0_10, %c0_11] : memref<1x8x32xbf16, #tpu.memory_space<vmem>>, vector<1x8x32xbf16>
    %17 = vector.shape_cast %16 : vector<1x8x32xbf16> to vector<8x32xbf16>
    %c0_12 = arith.constant 0 : index
    %c0_13 = arith.constant 0 : index
    %18 = vector.load %arg17[%c0_12, %c0_13] : memref<8x128xf32, #tpu.memory_space<vmem>>, vector<8x128xf32>
    %cst = arith.constant dense<0.000000e+00> : vector<8xf32>
    %19 = vector.multi_reduction <add>, %18, %cst [1] : vector<8x128xf32> to vector<8xf32>
    %20 = vector.shape_cast %19 : vector<8xf32> to vector<8x1xf32>
    %cst_14 = arith.constant 3.125000e-02 : f32
    %21 = vector.broadcast %cst_14 : f32 to vector<8x1xf32>
    %22 = arith.mulf %20, %21 : vector<8x1xf32>
    %23 = arith.mulf %18, %18 : vector<8x128xf32>
    %cst_15 = arith.constant dense<0.000000e+00> : vector<8xf32>
    %24 = vector.multi_reduction <add>, %23, %cst_15 [1] : vector<8x128xf32> to vector<8xf32>
    %25 = vector.shape_cast %24 : vector<8xf32> to vector<8x1xf32>
    %cst_16 = arith.constant 3.125000e-02 : f32
    %26 = vector.broadcast %cst_16 : f32 to vector<8x1xf32>
    %27 = arith.mulf %25, %26 : vector<8x1xf32>
    %28 = arith.mulf %22, %22 : vector<8x1xf32>
    %29 = arith.subf %27, %28 : vector<8x1xf32>
    %cst_17 = arith.constant 0.000000e+00 : f32
    %30 = vector.broadcast %cst_17 : f32 to vector<8x1xf32>
    %31 = arith.maximumf %29, %30 : vector<8x1xf32>
    %32 = vector.broadcast %22 : vector<8x1xf32> to vector<8x128xf32>
    %33 = arith.subf %18, %32 : vector<8x128xf32>
    %cst_18 = arith.constant 9.99999974E-6 : f32
    %34 = vector.broadcast %cst_18 : f32 to vector<8x1xf32>
    %35 = arith.addf %31, %34 : vector<8x1xf32>
    %36 = math.rsqrt %35 : vector<8x1xf32>
    %37 = vector.broadcast %36 : vector<8x1xf32> to vector<8x128xf32>
    %38 = arith.mulf %33, %37 : vector<8x128xf32>
    %39 = vector.broadcast %5 : vector<1x128xf32> to vector<8x128xf32>
    %40 = arith.mulf %38, %39 : vector<8x128xf32>
    %41 = vector.broadcast %6 : vector<1x128xf32> to vector<8x128xf32>
    %42 = arith.addf %40, %41 : vector<8x128xf32>
    %43 = arith.truncf %42 : vector<8x128xf32> to vector<8x128xbf16>
    %cst_19 = arith.constant dense<0.000000e+00> : vector<32x128xf32>
    %44 = tpu.matmul %15, %43, %cst_19 {dimension_numbers = #tpu.dot_dimension_numbers<[1], [0], [0], [1], [0, 0, 1, 1], [], []>} : vector<32x8xbf16>, vector<8x128xbf16>, vector<32x128xf32> -> vector<32x128xf32>
    %45 = arith.addf %44, %12 : vector<32x128xf32>
    %cst_20 = arith.constant 5.000000e-01 : f32
    %46 = vector.broadcast %cst_20 : f32 to vector<32x128xf32>
    %47 = arith.mulf %46, %45 : vector<32x128xf32>
    %cst_21 = arith.constant 4.471500e-02 : f32
    %48 = vector.broadcast %cst_21 : f32 to vector<32x128xf32>
    %49 = arith.mulf %48, %45 : vector<32x128xf32>
    %50 = arith.mulf %49, %45 : vector<32x128xf32>
    %51 = arith.mulf %50, %45 : vector<32x128xf32>
    %52 = arith.addf %45, %51 : vector<32x128xf32>
    %cst_22 = arith.constant 0.797884583 : f32
    %53 = vector.broadcast %cst_22 : f32 to vector<32x128xf32>
    %54 = arith.mulf %53, %52 : vector<32x128xf32>
    %55 = math.tanh %54 : vector<32x128xf32>
    %cst_23 = arith.constant 1.000000e+00 : f32
    %56 = vector.broadcast %cst_23 : f32 to vector<32x128xf32>
    %57 = arith.addf %56, %55 : vector<32x128xf32>
    %58 = arith.mulf %47, %57 : vector<32x128xf32>
    %59 = arith.truncf %58 : vector<32x128xf32> to vector<32x128xbf16>
    %cst_24 = arith.constant dense<0.000000e+00> : vector<8x128xf32>
    %60 = tpu.matmul %17, %59, %cst_24 {dimension_numbers = #tpu.dot_dimension_numbers<[1], [0], [0], [1], [0, 0, 1, 1], [], []>} : vector<8x32xbf16>, vector<32x128xbf16>, vector<8x128xf32> -> vector<8x128xf32>
    %61 = arith.addf %60, %13 : vector<8x128xf32>
    %62 = arith.addf %18, %61 : vector<8x128xf32>
    %c0_25 = arith.constant 0 : index
    %c0_26 = arith.constant 0 : index
    %63 = vector.load %arg17[%c0_25, %c0_26] : memref<8x128xf32, #tpu.memory_space<vmem>>, vector<8x128xf32>
    tpu.vector_store %arg17[%c0_25, %c0_26], %62 {strides = array<i32>} : memref<8x128xf32, #tpu.memory_space<vmem>>, vector<8x128xf32>,
    %c0_27 = arith.constant 0 : index
    %c0_28 = arith.constant 0 : index
    %64 = vector.load %arg17[%c0_27, %c0_28] : memref<8x128xf32, #tpu.memory_space<vmem>>, vector<8x128xf32>
    %cst_29 = arith.constant dense<0.000000e+00> : vector<8xf32>
    %65 = vector.multi_reduction <add>, %64, %cst_29 [1] : vector<8x128xf32> to vector<8xf32>
    %66 = vector.shape_cast %65 : vector<8xf32> to vector<8x1xf32>
    %cst_30 = arith.constant 3.125000e-02 : f32
    %67 = vector.broadcast %cst_30 : f32 to vector<8x1xf32>
    %68 = arith.mulf %66, %67 : vector<8x1xf32>
    %69 = arith.mulf %64, %64 : vector<8x128xf32>
    %cst_31 = arith.constant dense<0.000000e+00> : vector<8xf32>
    %70 = vector.multi_reduction <add>, %69, %cst_31 [1] : vector<8x128xf32> to vector<8xf32>
    %71 = vector.shape_cast %70 : vector<8xf32> to vector<8x1xf32>
    %cst_32 = arith.constant 3.125000e-02 : f32
    %72 = vector.broadcast %cst_32 : f32 to vector<8x1xf32>
    %73 = arith.mulf %71, %72 : vector<8x1xf32>
    %74 = arith.mulf %68, %68 : vector<8x1xf32>
    %75 = arith.subf %73, %74 : vector<8x1xf32>
    %cst_33 = arith.constant 0.000000e+00 : f32
    %76 = vector.broadcast %cst_33 : f32 to vector<8x1xf32>
    %77 = arith.maximumf %75, %76 : vector<8x1xf32>
    %78 = vector.broadcast %68 : vector<8x1xf32> to vector<8x128xf32>
    %79 = arith.subf %64, %78 : vector<8x128xf32>
    %cst_34 = arith.constant 9.99999974E-6 : f32
    %80 = vector.broadcast %cst_34 : f32 to vector<8x1xf32>
    %81 = arith.addf %77, %80 : vector<8x1xf32>
    %82 = math.rsqrt %81 : vector<8x1xf32>
    %83 = vector.broadcast %82 : vector<8x1xf32> to vector<8x128xf32>
    %84 = arith.mulf %79, %83 : vector<8x128xf32>
    %85 = vector.broadcast %7 : vector<1x128xf32> to vector<8x128xf32>
    %86 = arith.mulf %84, %85 : vector<8x128xf32>
    %87 = vector.broadcast %8 : vector<1x128xf32> to vector<8x128xf32>
    %88 = arith.addf %86, %87 : vector<8x128xf32>
    %89 = arith.truncf %88 : vector<8x128xf32> to vector<8x128xbf16>
    %c0_35 = arith.constant 0 : index
    %c0_36 = arith.constant 0 : index
    %c0_37 = arith.constant 0 : index
    %90 = vector.load %arg9[%c0_35, %c0_36, %c0_37] : memref<1x128x128xbf16, #tpu.memory_space<vmem>>, vector<1x128x128xbf16>
    %91 = vector.shape_cast %90 : vector<1x128x128xbf16> to vector<128x128xbf16>
    %cst_38 = arith.constant dense<0.000000e+00> : vector<8x128xf32>
    %92 = tpu.matmul %89, %91, %cst_38 {dimension_numbers = #tpu.dot_dimension_numbers<[1], [0], [0], [1], [0, 0, 1, 1], [], []>} : vector<8x128xbf16>, vector<128x128xbf16>, vector<8x128xf32> -> vector<8x128xf32>
    %c0_39 = arith.constant 0 : index
    %c0_40 = arith.constant 0 : index
    %c0_41 = arith.constant 0 : index
    %93 = vector.load %arg10[%c0_39, %c0_40, %c0_41] : memref<1x1x128xf32, #tpu.memory_space<vmem>>, vector<1x1x128xf32>
    %94 = vector.shape_cast %93 : vector<1x1x128xf32> to vector<1x128xf32>
    %95 = vector.broadcast %94 : vector<1x128xf32> to vector<8x128xf32>
    %96 = arith.addf %92, %95 : vector<8x128xf32>
    %cst_42 = arith.constant 5.000000e-01 : f32
    %97 = vector.broadcast %cst_42 : f32 to vector<8x128xf32>
    %98 = arith.mulf %97, %96 : vector<8x128xf32>
    %cst_43 = arith.constant 4.471500e-02 : f32
    %99 = vector.broadcast %cst_43 : f32 to vector<8x128xf32>
    %100 = arith.mulf %99, %96 : vector<8x128xf32>
    %101 = arith.mulf %100, %96 : vector<8x128xf32>
    %102 = arith.mulf %101, %96 : vector<8x128xf32>
    %103 = arith.addf %96, %102 : vector<8x128xf32>
    %cst_44 = arith.constant 0.797884583 : f32
    %104 = vector.broadcast %cst_44 : f32 to vector<8x128xf32>
    %105 = arith.mulf %104, %103 : vector<8x128xf32>
    %106 = math.tanh %105 : vector<8x128xf32>
    %cst_45 = arith.constant 1.000000e+00 : f32
    %107 = vector.broadcast %cst_45 : f32 to vector<8x128xf32>
    %108 = arith.addf %107, %106 : vector<8x128xf32>
    %109 = arith.mulf %98, %108 : vector<8x128xf32>
    %110 = arith.truncf %109 : vector<8x128xf32> to vector<8x128xbf16>
    %c0_46 = arith.constant 0 : index
    %c0_47 = arith.constant 0 : index
    %c0_48 = arith.constant 0 : index
    %111 = vector.load %arg11[%c0_46, %c0_47, %c0_48] : memref<1x128x128xbf16, #tpu.memory_space<vmem>>, vector<1x128x128xbf16>
    %112 = vector.shape_cast %111 : vector<1x128x128xbf16> to vector<128x128xbf16>
    %cst_49 = arith.constant dense<0.000000e+00> : vector<8x128xf32>
    %113 = tpu.matmul %110, %112, %cst_49 {dimension_numbers = #tpu.dot_dimension_numbers<[1], [0], [0], [1], [0, 0, 1, 1], [], []>} : vector<8x128xbf16>, vector<128x128xbf16>, vector<8x128xf32> -> vector<8x128xf32>
    %114 = vector.broadcast %9 : vector<1x128xf32> to vector<8x128xf32>
    %115 = arith.addf %113, %114 : vector<8x128xf32>
    %116 = arith.addf %64, %115 : vector<8x128xf32>
    %c0_50 = arith.constant 0 : index
    %c0_51 = arith.constant 0 : index
    %117 = vector.load %arg17[%c0_50, %c0_51] : memref<8x128xf32, #tpu.memory_space<vmem>>, vector<8x128xf32>
    tpu.vector_store %arg17[%c0_50, %c0_51], %116 {strides = array<i32>} : memref<8x128xf32, #tpu.memory_space<vmem>>, vector<8x128xf32>,
    %c1_i32 = arith.constant 1 : i32
    %118 = arith.cmpi eq, %arg1, %c1_i32 : i32
    %119 = arith.extui %118 : i1 to i32
    %c0_i32_52 = arith.constant 0 : i32
    %120 = arith.cmpi ne, %119, %c0_i32_52 : i32
    scf.if %120 {
      %c0_53 = arith.constant 0 : index
      %c0_54 = arith.constant 0 : index
      %121 = vector.load %arg17[%c0_53, %c0_54] : memref<8x128xf32, #tpu.memory_space<vmem>>, vector<8x128xf32>
      %c0_55 = arith.constant 0 : index
      %c0_56 = arith.constant 0 : index
      %122 = vector.load %arg12[%c0_55, %c0_56] : memref<1x128xf32, #tpu.memory_space<vmem>>, vector<1x128xf32>
      %c0_57 = arith.constant 0 : index
      %c0_58 = arith.constant 0 : index
      %123 = vector.load %arg13[%c0_57, %c0_58] : memref<1x128xf32, #tpu.memory_space<vmem>>, vector<1x128xf32>
      %cst_59 = arith.constant dense<0.000000e+00> : vector<8xf32>
      %124 = vector.multi_reduction <add>, %121, %cst_59 [1] : vector<8x128xf32> to vector<8xf32>
      %125 = vector.shape_cast %124 : vector<8xf32> to vector<8x1xf32>
      %cst_60 = arith.constant 3.125000e-02 : f32
      %126 = vector.broadcast %cst_60 : f32 to vector<8x1xf32>
      %127 = arith.mulf %125, %126 : vector<8x1xf32>
      %128 = arith.mulf %121, %121 : vector<8x128xf32>
      %cst_61 = arith.constant dense<0.000000e+00> : vector<8xf32>
      %129 = vector.multi_reduction <add>, %128, %cst_61 [1] : vector<8x128xf32> to vector<8xf32>
      %130 = vector.shape_cast %129 : vector<8xf32> to vector<8x1xf32>
      %cst_62 = arith.constant 3.125000e-02 : f32
      %131 = vector.broadcast %cst_62 : f32 to vector<8x1xf32>
      %132 = arith.mulf %130, %131 : vector<8x1xf32>
      %133 = arith.mulf %127, %127 : vector<8x1xf32>
      %134 = arith.subf %132, %133 : vector<8x1xf32>
      %cst_63 = arith.constant 0.000000e+00 : f32
      %135 = vector.broadcast %cst_63 : f32 to vector<8x1xf32>
      %136 = arith.maximumf %134, %135 : vector<8x1xf32>
      %137 = vector.broadcast %127 : vector<8x1xf32> to vector<8x128xf32>
      %138 = arith.subf %121, %137 : vector<8x128xf32>
      %cst_64 = arith.constant 9.99999974E-6 : f32
      %139 = vector.broadcast %cst_64 : f32 to vector<8x1xf32>
      %140 = arith.addf %136, %139 : vector<8x1xf32>
      %141 = math.rsqrt %140 : vector<8x1xf32>
      %142 = vector.broadcast %141 : vector<8x1xf32> to vector<8x128xf32>
      %143 = arith.mulf %138, %142 : vector<8x128xf32>
      %144 = vector.broadcast %122 : vector<1x128xf32> to vector<8x128xf32>
      %145 = arith.mulf %143, %144 : vector<8x128xf32>
      %146 = vector.broadcast %123 : vector<1x128xf32> to vector<8x128xf32>
      %147 = arith.addf %145, %146 : vector<8x128xf32>
      %cst_65 = arith.constant dense<0.000000e+00> : vector<128xf32>
      %148 = vector.multi_reduction <add>, %147, %cst_65 [0] : vector<8x128xf32> to vector<128xf32>
      %149 = vector.shape_cast %148 : vector<128xf32> to vector<1x128xf32>
      %cst_66 = arith.constant 1.250000e-01 : f32
      %150 = vector.broadcast %cst_66 : f32 to vector<1x128xf32>
      %151 = arith.mulf %149, %150 : vector<1x128xf32>
      %152 = arith.truncf %151 : vector<1x128xf32> to vector<1x128xbf16>
      %c0_67 = arith.constant 0 : index
      %c0_68 = arith.constant 0 : index
      %153 = vector.load %arg14[%c0_67, %c0_68] : memref<128x128xbf16, #tpu.memory_space<vmem>>, vector<128x128xbf16>
      %cst_69 = arith.constant dense<0.000000e+00> : vector<1x128xf32>
      %154 = tpu.matmul %152, %153, %cst_69 {dimension_numbers = #tpu.dot_dimension_numbers<[1], [0], [0], [1], [0, 0, 1, 1], [], []>} : vector<1x128xbf16>, vector<128x128xbf16>, vector<1x128xf32> -> vector<1x128xf32>
      %c0_70 = arith.constant 0 : index
      %c0_71 = arith.constant 0 : index
      %155 = vector.load %arg15[%c0_70, %c0_71] : memref<1x128xf32, #tpu.memory_space<vmem>>, vector<1x128xf32>
      %156 = arith.addf %154, %155 : vector<1x128xf32>
      %157 = vector.shape_cast %156 : vector<1x128xf32> to vector<1x1x128xf32>
      %c0_72 = arith.constant 0 : index
      %c0_73 = arith.constant 0 : index
      %c0_74 = arith.constant 0 : index
      %158 = vector.load %arg16[%c0_72, %c0_73, %c0_74] : memref<1x1x128xf32, #tpu.memory_space<vmem>>, vector<1x1x128xf32>
      tpu.vector_store %arg16[%c0_72, %c0_73, %c0_74], %157 {strides = array<i32>} : memref<1x1x128xf32, #tpu.memory_space<vmem>>, vector<1x1x128xf32>,
    } else {
    }
    return
  }
  func.func @transform_0(%arg0: i32, %arg1: i32) -> (i32, i32, i32) {
    %c0_i32 = arith.constant 0 : i32
    %c0_i32_0 = arith.constant 0 : i32
    %c0_i32_1 = arith.constant 0 : i32
    return %arg0, %c0_i32, %c0_i32_0 : i32, i32, i32
  }
  func.func @transform_1(%arg0: i32, %arg1: i32) -> (i32, i32) {
    %c0_i32 = arith.constant 0 : i32
    %c0_i32_0 = arith.constant 0 : i32
    %c0_i32_1 = arith.constant 0 : i32
    return %c0_i32, %c0_i32_0 : i32, i32
  }
  func.func @transform_2(%arg0: i32, %arg1: i32) -> (i32, i32) {
    %c0_i32 = arith.constant 0 : i32
    %c0_i32_0 = arith.constant 0 : i32
    %c0_i32_1 = arith.constant 0 : i32
    return %c0_i32, %c0_i32_0 : i32, i32
  }
  func.func @transform_3(%arg0: i32, %arg1: i32) -> (i32, i32, i32) {
    %c0_i32 = arith.constant 0 : i32
    %c0_i32_0 = arith.constant 0 : i32
    %c0_i32_1 = arith.constant 0 : i32
    return %arg1, %c0_i32, %c0_i32_0 : i32, i32, i32
  }
  func.func @transform_4(%arg0: i32, %arg1: i32) -> (i32, i32, i32) {
    %c0_i32 = arith.constant 0 : i32
    %c0_i32_0 = arith.constant 0 : i32
    %c0_i32_1 = arith.constant 0 : i32
    return %arg1, %c0_i32, %c0_i32_0 : i32, i32, i32
  }
  func.func @transform_5(%arg0: i32, %arg1: i32) -> (i32, i32, i32) {
    %c0_i32 = arith.constant 0 : i32
    %c0_i32_0 = arith.constant 0 : i32
    %c0_i32_1 = arith.constant 0 : i32
    return %arg1, %c0_i32, %c0_i32_0 : i32, i32, i32
  }
  func.func @transform_6(%arg0: i32, %arg1: i32) -> (i32, i32, i32) {
    %c0_i32 = arith.constant 0 : i32
    %c0_i32_0 = arith.constant 0 : i32
    %c0_i32_1 = arith.constant 0 : i32
    return %arg1, %c0_i32, %c0_i32_0 : i32, i32, i32
  }
  func.func @transform_7(%arg0: i32, %arg1: i32) -> (i32, i32, i32) {
    %c0_i32 = arith.constant 0 : i32
    %c0_i32_0 = arith.constant 0 : i32
    %c0_i32_1 = arith.constant 0 : i32
    return %arg1, %c0_i32, %c0_i32_0 : i32, i32, i32
  }
  func.func @transform_8(%arg0: i32, %arg1: i32) -> (i32, i32, i32) {
    %c0_i32 = arith.constant 0 : i32
    %c0_i32_0 = arith.constant 0 : i32
    %c0_i32_1 = arith.constant 0 : i32
    return %arg1, %c0_i32, %c0_i32_0 : i32, i32, i32
  }
  func.func @transform_9(%arg0: i32, %arg1: i32) -> (i32, i32, i32) {
    %c0_i32 = arith.constant 0 : i32
    %c0_i32_0 = arith.constant 0 : i32
    %c0_i32_1 = arith.constant 0 : i32
    return %arg1, %c0_i32, %c0_i32_0 : i32, i32, i32
  }
  func.func @transform_10(%arg0: i32, %arg1: i32) -> (i32, i32) {
    %c0_i32 = arith.constant 0 : i32
    %c0_i32_0 = arith.constant 0 : i32
    %c0_i32_1 = arith.constant 0 : i32
    return %c0_i32, %c0_i32_0 : i32, i32
  }
  func.func @transform_11(%arg0: i32, %arg1: i32) -> (i32, i32) {
    %c0_i32 = arith.constant 0 : i32
    %c0_i32_0 = arith.constant 0 : i32
    %c0_i32_1 = arith.constant 0 : i32
    return %c0_i32, %c0_i32_0 : i32, i32
  }
  func.func @transform_12(%arg0: i32, %arg1: i32) -> (i32, i32) {
    %c0_i32 = arith.constant 0 : i32
    %c0_i32_0 = arith.constant 0 : i32
    %c0_i32_1 = arith.constant 0 : i32
    return %c0_i32, %c0_i32_0 : i32, i32
  }
  func.func @transform_13(%arg0: i32, %arg1: i32) -> (i32, i32) {
    %c0_i32 = arith.constant 0 : i32
    %c0_i32_0 = arith.constant 0 : i32
    %c0_i32_1 = arith.constant 0 : i32
    return %c0_i32, %c0_i32_0 : i32, i32
  }
  func.func @transform_14(%arg0: i32, %arg1: i32) -> (i32, i32, i32) {
    %c0_i32 = arith.constant 0 : i32
    %c0_i32_0 = arith.constant 0 : i32
    %c0_i32_1 = arith.constant 0 : i32
    return %arg0, %c0_i32, %c0_i32_0 : i32, i32, i32
  }
}

</mosaic_0001>

<llo_original>
// kernel: tpu_custom_call.1
$region0: #{tpu_custom_call.1}
  #allocation0 [shape = 'u32[]', space=smem, size = 0x4, offset = 0x4, fixed_abs, tag = 'smem constant byte address 0x4 - core index']
  #allocation1 [shape = 'u32[144,128]{1,0:T(1,128)}', space=vmem, size = 0x12000, scoped, tag = 'internal scratch']
  #allocation2 [shape = 'f32[8,128]{1,0:T(8,128)}', space=vmem, size = 0x1000, scoped, tag = 'scratch operand']
  %s0 = inlined_call_operand.vmem [shape: bf16[2,8,128], index: 0, kind: input, shape index: {}]
  %s1 = inlined_call_operand.hbm [shape: bf16[128,128], index: 1, kind: input, shape index: {}]
  %s2 = inlined_call_operand.hbm [shape: f32[1,128], index: 2, kind: input, shape index: {}]
  %s3 = inlined_call_operand.vmem [shape: f32[2,5,128], index: 3, kind: input, shape index: {}]
  %s4 = inlined_call_operand.vmem [shape: bf16[2,32,8], index: 4, kind: input, shape index: {}]
  %s5 = inlined_call_operand.hbm [shape: bf16[2,8,32], index: 5, kind: input, shape index: {}]
  %s6 = inlined_call_operand.vmem [shape: f32[2,40,128], index: 6, kind: input, shape index: {}]
  %s7 = inlined_call_operand.hbm [shape: bf16[2,128,128], index: 7, kind: input, shape index: {}]
  %s8 = inlined_call_operand.vmem [shape: f32[2,1,128], index: 8, kind: input, shape index: {}]
  %s9 = inlined_call_operand.hbm [shape: bf16[2,128,128], index: 9, kind: input, shape index: {}]
  %s10 = inlined_call_operand.vmem [shape: f32[1,128], index: 10, kind: input, shape index: {}]
  %s11 = inlined_call_operand.vmem [shape: f32[1,128], index: 11, kind: input, shape index: {}]
  %s12 = inlined_call_operand.hbm [shape: bf16[128,128], index: 12, kind: input, shape index: {}]
  %s13 = inlined_call_operand.vmem [shape: f32[1,128], index: 13, kind: input, shape index: {}]
  %s14 = inlined_call_operand.hbm [shape: f32[2,1,128], index: 14, kind: output, shape index: {}]
  %s15 = sld [smem:[#allocation0]]
  $region121: #{tpu_custom_call.1} parent=0
    _
  %s17 = ssub.s32 1, %s15
  %s18 = scalar_select 0, %s17, %s15
  $region1: #{tpu_custom_call.1} parent=0
    #allocation3 [shape = 'u8[32768]{0}', space=vmem, size = 0x8000, scoped, tag = 'input window, operand 1, single buffered']
    #allocation4 [shape = 's32[2]{0}', space=sflag, size = 0x8, scoped, tag = 'scoped memory for tpu_custom_call.1']
    #allocation5 [shape = 's32[2]{0}', space=sflag, size = 0x8, scoped, tag = 'scoped memory for tpu_custom_call.1']
    #allocation6 [shape = 'u8[512]{0}', space=vmem, size = 0x400, scoped, tag = 'input window, operand 2, single buffered']
    #allocation7 [shape = 's32[1]{0}', space=sflag, size = 0x4, scoped, tag = 'scoped memory for tpu_custom_call.1']
    #allocation8 [shape = 'u8[4096]{0}', space=vmem, size = 0x1000, scoped, tag = 'input window, operand 5']
    #allocation9 [shape = 'u8[65536]{0}', space=vmem, size = 0x10000, scoped, tag = 'input window, operand 7']
    #allocation10 [shape = 'u8[65536]{0}', space=vmem, size = 0x10000, scoped, tag = 'input window, operand 9']
    #allocation11 [shape = 'u8[32768]{0}', space=vmem, size = 0x8000, scoped, tag = 'input window, operand 12, single buffered']
    #allocation12 [shape = 'u8[1024]{0}', space=vmem, size = 0x400, scoped, tag = 'output window, operand 0']
    %19 = vsyncpa [#allocation4], 0
    %20 = vsyncpa [#allocation7], 0
    %21 = vsyncpa [#allocation5], 0
    %s22 = scalar_lea.sflag [#allocation5], 1
    %23 = vsyncpa %s22, 0
    loop: start=0, step=1, limit=6
    $region2: #{tpu_custom_call.1} parent=1 // loop_pre_header
      _
    $region3: #{tpu_custom_call.1} parent=1 // loop_header
      %s25 = sphi 0, %s29
      %p26 = scmp.ge.s32.totalorder %s25, 6
      %s32 = sphi 0, %s44
      %s33 = sphi 0, %s40
      %s34 = sphi 0, %s32
      %s35 = sphi 0, %s33
      %s36 = sphi 0, %s34
      %s37 = sphi 0, %s35
      %s47 = sphi 0, %s49
      %s50 = sphi 0, %s47
      %s51 = sphi 0, %s50
      %s67 = sphi 0, %s51
      %s71 = sphi 0, %s71
      %s73 = sphi 0, %s71
      %s74 = sphi 0, %s73
      %s88 = sphi 0, %s74
      %s92 = sphi 0, %s92
      %s94 = sphi 0, %s92
      %s95 = sphi 0, %s94
      %s109 = sphi 0, %s95
      %s115 = sphi 0, %s117
      %s118 = sphi 0, %s115
      %s119 = sphi 0, %s118
      %s135 = sphi 0, %s119
      %s141 = sphi 0, %s143
      %s144 = sphi 0, %s141
      %s145 = sphi 0, %s144
      %s161 = sphi 0, %s145
      %s167 = sphi 0, %s169
      %s170 = sphi 0, %s167
      %s171 = sphi 0, %s170
      %s187 = sphi 0, %s171
      %s193 = sphi 0, %s195
      %s196 = sphi 0, %s193
      %s197 = sphi 0, %s196
      %s213 = sphi 0, %s197
      %s219 = sphi 0, %s221
      %s222 = sphi 0, %s219
      %s223 = sphi 0, %s222
      %s239 = sphi 0, %s223
      %s245 = sphi 0, %s247
      %s248 = sphi 0, %s245
      %s249 = sphi 0, %s248
      %s265 = sphi 0, %s249
      %s271 = sphi 0, %s273
      %s274 = sphi 0, %s271
      %s275 = sphi 0, %s274
      %s291 = sphi 0, %s275
      %s295 = sphi 0, %s295
      %s297 = sphi 0, %s295
      %s298 = sphi 0, %s297
      %s312 = sphi 0, %s298
      %s316 = sphi 0, %s316
      %s318 = sphi 0, %s316
      %s319 = sphi 0, %s318
      %s333 = sphi 0, %s319
      %s337 = sphi 0, %s337
      %s339 = sphi 0, %s337
      %s340 = sphi 0, %s339
      %s354 = sphi 0, %s340
      %s358 = sphi 0, %s358
      %s360 = sphi 0, %s358
      %s361 = sphi 0, %s360
      %s375 = sphi 0, %s361
      %s381 = sphi 0, %s383
      %s384 = sphi 0, %s381
      %s385 = sphi 0, %s384
      %s401 = sphi 0, %s385
    $region4: #{tpu_custom_call.1} parent=1 // loop_header_branch
      %28 = sbr.rel (%p26) target = $region8
    $region5: #{tpu_custom_call.1} parent=1 // loop_body
      %s30 = ssub.s32 %s25, 1
      %s31 = ssub.s32 %s25, 2
      %s38 = sadd.s32 1, %s33
      %p39 = scmp.ge.s32.totalorder %s38, 2
      %s40 = scalar_select %p39, 0, %s38
      %s41 = sadd.s32 1, %s32
      %s42 = scalar_select %p39, %s41, %s32
      %p43 = scmp.ge.s32.totalorder %s42, 2
      %s44 = scalar_select %p43, 0, %s42
      %s45 = ssub.s32 %s32, %s44
      %p46 = scmp.eq.s32.totalorder %s45, 0
      %s48 = sadd.s32 %s47, 1
      %s49 = scalar_select %p46, %s47, %s48
      %p52 = pneg %p46
      %p53 = scmp.eq.s32.totalorder %s25, 3
      %p54 = por %p52, %p53
      %p55 = scmp.ne.s32.totalorder %s47, %s50
      %p56 = scmp.eq.s32.totalorder %s25, 0
      %p57 = por %p55, %p56
      %p58 = scmp.ne.s32.totalorder %s47, %s50
      %p59 = scmp.eq.s32.totalorder %s30, 3
      %p60 = por %p58, %p59
      %p61 = scmp.ne.s32.totalorder %s50, %s51
      %p62 = scmp.eq.s32.totalorder %s30, 0
      %p63 = por %p61, %p62
      %p64 = scmp.ne.s32.totalorder %s50, %s51
      %p65 = scmp.eq.s32.totalorder %s31, 3
      %p66 = por %p64, %p65
      %p68 = scmp.ne.s32.totalorder %s51, %s67
      %p69 = scmp.eq.s32.totalorder %s31, 0
      %p70 = por %p68, %p69
      %s72 = sadd.s32 %s71, 1
      %p75 = scmp.eq.s32.totalorder %s25, 3
      %p76 = scmp.ne.s32.totalorder %s71, %s73
      %p77 = scmp.eq.s32.totalorder %s25, 0
      %p78 = por %p76, %p77
      %p79 = scmp.ne.s32.totalorder %s71, %s73
      %p80 = scmp.eq.s32.totalorder %s30, 3
      %p81 = por %p79, %p80
      %p82 = scmp.ne.s32.totalorder %s73, %s74
      %p83 = scmp.eq.s32.totalorder %s30, 0
      %p84 = por %p82, %p83
      %p85 = scmp.ne.s32.totalorder %s73, %s74
      %p86 = scmp.eq.s32.totalorder %s31, 3
      %p87 = por %p85, %p86
      %p89 = scmp.ne.s32.totalorder %s74, %s88
      %p90 = scmp.eq.s32.totalorder %s31, 0
      %p91 = por %p89, %p90
      %s93 = sadd.s32 %s92, 1
      %p96 = scmp.eq.s32.totalorder %s25, 3
      %p97 = scmp.ne.s32.totalorder %s92, %s94
      %p98 = scmp.eq.s32.totalorder %s25, 0
      %p99 = por %p97, %p98
      %p100 = scmp.ne.s32.totalorder %s92, %s94
      %p101 = scmp.eq.s32.totalorder %s30, 3
      %p102 = por %p100, %p101
      %p103 = scmp.ne.s32.totalorder %s94, %s95
      %p104 = scmp.eq.s32.totalorder %s30, 0
      %p105 = por %p103, %p104
      %p106 = scmp.ne.s32.totalorder %s94, %s95
      %p107 = scmp.eq.s32.totalorder %s31, 3
      %p108 = por %p106, %p107
      %p110 = scmp.ne.s32.totalorder %s95, %s109
      %p111 = scmp.eq.s32.totalorder %s31, 0
      %p112 = por %p110, %p111
      %s113 = ssub.s32 %s33, %s40
      %p114 = scmp.eq.s32.totalorder %s113, 0
      %s116 = sadd.s32 %s115, 1
      %s117 = scalar_select %p114, %s115, %s116
      %p120 = pneg %p114
      %p121 = scmp.eq.s32.totalorder %s25, 3
      %p122 = por %p120, %p121
      %p123 = scmp.ne.s32.totalorder %s115, %s118
      %p124 = scmp.eq.s32.totalorder %s25, 0
      %p125 = por %p123, %p124
      %p126 = scmp.ne.s32.totalorder %s115, %s118
      %p127 = scmp.eq.s32.totalorder %s30, 3
      %p128 = por %p126, %p127
      %p129 = scmp.ne.s32.totalorder %s118, %s119
      %p130 = scmp.eq.s32.totalorder %s30, 0
      %p131 = por %p129, %p130
      %p132 = scmp.ne.s32.totalorder %s118, %s119
      %p133 = scmp.eq.s32.totalorder %s31, 3
      %p134 = por %p132, %p133
      %p136 = scmp.ne.s32.totalorder %s119, %s135
      %p137 = scmp.eq.s32.totalorder %s31, 0
      %p138 = por %p136, %p137
      %s139 = ssub.s32 %s33, %s40
      %p140 = scmp.eq.s32.totalorder %s139, 0
      %s142 = sadd.s32 %s141, 1
      %s143 = scalar_select %p140, %s141, %s142
      %p146 = pneg %p140
      %p147 = scmp.eq.s32.totalorder %s25, 3
      %p148 = por %p146, %p147
      %p149 = scmp.ne.s32.totalorder %s141, %s144
      %p150 = scmp.eq.s32.totalorder %s25, 0
      %p151 = por %p149, %p150
      %p152 = scmp.ne.s32.totalorder %s141, %s144
      %p153 = scmp.eq.s32.totalorder %s30, 3
      %p154 = por %p152, %p153
      %p155 = scmp.ne.s32.totalorder %s144, %s145
      %p156 = scmp.eq.s32.totalorder %s30, 0
      %p157 = por %p155, %p156
      %p158 = scmp.ne.s32.totalorder %s144, %s145
      %p159 = scmp.eq.s32.totalorder %s31, 3
      %p160 = por %p158, %p159
      %p162 = scmp.ne.s32.totalorder %s145, %s161
      %p163 = scmp.eq.s32.totalorder %s31, 0
      %p164 = por %p162, %p163
      %s165 = ssub.s32 %s33, %s40
      %p166 = scmp.eq.s32.totalorder %s165, 0
      %s168 = sadd.s32 %s167, 1
      %s169 = scalar_select %p166, %s167, %s168
      %p172 = pneg %p166
      %p173 = scmp.eq.s32.totalorder %s25, 3
      %p174 = por %p172, %p173
      %p175 = scmp.ne.s32.totalorder %s167, %s170
      %p176 = scmp.eq.s32.totalorder %s25, 0
      %p177 = por %p175, %p176
      %p178 = scmp.ne.s32.totalorder %s167, %s170
      %p179 = scmp.eq.s32.totalorder %s30, 3
      %p180 = por %p178, %p179
      %p181 = scmp.ne.s32.totalorder %s170, %s171
      %p182 = scmp.eq.s32.totalorder %s30, 0
      %p183 = por %p181, %p182
      %p184 = scmp.ne.s32.totalorder %s170, %s171
      %p185 = scmp.eq.s32.totalorder %s31, 3
      %p186 = por %p184, %p185
      %p188 = scmp.ne.s32.totalorder %s171, %s187
      %p189 = scmp.eq.s32.totalorder %s31, 0
      %p190 = por %p188, %p189
      %s191 = ssub.s32 %s33, %s40
      %p192 = scmp.eq.s32.totalorder %s191, 0
      %s194 = sadd.s32 %s193, 1
      %s195 = scalar_select %p192, %s193, %s194
      %p198 = pneg %p192
      %p199 = scmp.eq.s32.totalorder %s25, 3
      %p200 = por %p198, %p199
      %p201 = scmp.ne.s32.totalorder %s193, %s196
      %p202 = scmp.eq.s32.totalorder %s25, 0
      %p203 = por %p201, %p202
      %p204 = scmp.ne.s32.totalorder %s193, %s196
      %p205 = scmp.eq.s32.totalorder %s30, 3
      %p206 = por %p204, %p205
      %p207 = scmp.ne.s32.totalorder %s196, %s197
      %p208 = scmp.eq.s32.totalorder %s30, 0
      %p209 = por %p207, %p208
      %p210 = scmp.ne.s32.totalorder %s196, %s197
      %p211 = scmp.eq.s32.totalorder %s31, 3
      %p212 = por %p210, %p211
      %p214 = scmp.ne.s32.totalorder %s197, %s213
      %p215 = scmp.eq.s32.totalorder %s31, 0
      %p216 = por %p214, %p215
      %s217 = ssub.s32 %s33, %s40
      %p218 = scmp.eq.s32.totalorder %s217, 0
      %s220 = sadd.s32 %s219, 1
      %s221 = scalar_select %p218, %s219, %s220
      %p224 = pneg %p218
      %p225 = scmp.eq.s32.totalorder %s25, 3
      %p226 = por %p224, %p225
      %p227 = scmp.ne.s32.totalorder %s219, %s222
      %p228 = scmp.eq.s32.totalorder %s25, 0
      %p229 = por %p227, %p228
      %p230 = scmp.ne.s32.totalorder %s219, %s222
      %p231 = scmp.eq.s32.totalorder %s30, 3
      %p232 = por %p230, %p231
      %p233 = scmp.ne.s32.totalorder %s222, %s223
      %p234 = scmp.eq.s32.totalorder %s30, 0
      %p235 = por %p233, %p234
      %p236 = scmp.ne.s32.totalorder %s222, %s223
      %p237 = scmp.eq.s32.totalorder %s31, 3
      %p238 = por %p236, %p237
      %p240 = scmp.ne.s32.totalorder %s223, %s239
      %p241 = scmp.eq.s32.totalorder %s31, 0
      %p242 = por %p240, %p241
      %s243 = ssub.s32 %s33, %s40
      %p244 = scmp.eq.s32.totalorder %s243, 0
      %s246 = sadd.s32 %s245, 1
      %s247 = scalar_select %p244, %s245, %s246
      %p250 = pneg %p244
      %p251 = scmp.eq.s32.totalorder %s25, 3
      %p252 = por %p250, %p251
      %p253 = scmp.ne.s32.totalorder %s245, %s248
      %p254 = scmp.eq.s32.totalorder %s25, 0
      %p255 = por %p253, %p254
      %p256 = scmp.ne.s32.totalorder %s245, %s248
      %p257 = scmp.eq.s32.totalorder %s30, 3
      %p258 = por %p256, %p257
      %p259 = scmp.ne.s32.totalorder %s248, %s249
      %p260 = scmp.eq.s32.totalorder %s30, 0
      %p261 = por %p259, %p260
      %p262 = scmp.ne.s32.totalorder %s248, %s249
      %p263 = scmp.eq.s32.totalorder %s31, 3
      %p264 = por %p262, %p263
      %p266 = scmp.ne.s32.totalorder %s249, %s265
      %p267 = scmp.eq.s32.totalorder %s31, 0
      %p268 = por %p266, %p267
      %s269 = ssub.s32 %s33, %s40
      %p270 = scmp.eq.s32.totalorder %s269, 0
      %s272 = sadd.s32 %s271, 1
      %s273 = scalar_select %p270, %s271, %s272
      %p276 = pneg %p270
      %p277 = scmp.eq.s32.totalorder %s25, 3
      %p278 = por %p276, %p277
      %p279 = scmp.ne.s32.totalorder %s271, %s274
      %p280 = scmp.eq.s32.totalorder %s25, 0
      %p281 = por %p279, %p280
      %p282 = scmp.ne.s32.totalorder %s271, %s274
      %p283 = scmp.eq.s32.totalorder %s30, 3
      %p284 = por %p282, %p283
      %p285 = scmp.ne.s32.totalorder %s274, %s275
      %p286 = scmp.eq.s32.totalorder %s30, 0
      %p287 = por %p285, %p286
      %p288 = scmp.ne.s32.totalorder %s274, %s275
      %p289 = scmp.eq.s32.totalorder %s31, 3
      %p290 = por %p288, %p289
      %p292 = scmp.ne.s32.totalorder %s275, %s291
      %p293 = scmp.eq.s32.totalorder %s31, 0
      %p294 = por %p292, %p293
      %s296 = sadd.s32 %s295, 1
      %p299 = scmp.eq.s32.totalorder %s25, 3
      %p300 = scmp.ne.s32.totalorder %s295, %s297
      %p301 = scmp.eq.s32.totalorder %s25, 0
      %p302 = por %p300, %p301
      %p303 = scmp.ne.s32.totalorder %s295, %s297
      %p304 = scmp.eq.s32.totalorder %s30, 3
      %p305 = por %p303, %p304
      %p306 = scmp.ne.s32.totalorder %s297, %s298
      %p307 = scmp.eq.s32.totalorder %s30, 0
      %p308 = por %p306, %p307
      %p309 = scmp.ne.s32.totalorder %s297, %s298
      %p310 = scmp.eq.s32.totalorder %s31, 3
      %p311 = por %p309, %p310
      %p313 = scmp.ne.s32.totalorder %s298, %s312
      %p314 = scmp.eq.s32.totalorder %s31, 0
      %p315 = por %p313, %p314
      %s317 = sadd.s32 %s316, 1
      %p320 = scmp.eq.s32.totalorder %s25, 3
      %p321 = scmp.ne.s32.totalorder %s316, %s318
      %p322 = scmp.eq.s32.totalorder %s25, 0
      %p323 = por %p321, %p322
      %p324 = scmp.ne.s32.totalorder %s316, %s318
      %p325 = scmp.eq.s32.totalorder %s30, 3
      %p326 = por %p324, %p325
      %p327 = scmp.ne.s32.totalorder %s318, %s319
      %p328 = scmp.eq.s32.totalorder %s30, 0
      %p329 = por %p327, %p328
      %p330 = scmp.ne.s32.totalorder %s318, %s319
      %p331 = scmp.eq.s32.totalorder %s31, 3
      %p332 = por %p330, %p331
      %p334 = scmp.ne.s32.totalorder %s319, %s333
      %p335 = scmp.eq.s32.totalorder %s31, 0
      %p336 = por %p334, %p335
      %s338 = sadd.s32 %s337, 1
      %p341 = scmp.eq.s32.totalorder %s25, 3
      %p342 = scmp.ne.s32.totalorder %s337, %s339
      %p343 = scmp.eq.s32.totalorder %s25, 0
      %p344 = por %p342, %p343
      %p345 = scmp.ne.s32.totalorder %s337, %s339
      %p346 = scmp.eq.s32.totalorder %s30, 3
      %p347 = por %p345, %p346
      %p348 = scmp.ne.s32.totalorder %s339, %s340
      %p349 = scmp.eq.s32.totalorder %s30, 0
      %p350 = por %p348, %p349
      %p351 = scmp.ne.s32.totalorder %s339, %s340
      %p352 = scmp.eq.s32.totalorder %s31, 3
      %p353 = por %p351, %p352
      %p355 = scmp.ne.s32.totalorder %s340, %s354
      %p356 = scmp.eq.s32.totalorder %s31, 0
      %p357 = por %p355, %p356
      %s359 = sadd.s32 %s358, 1
      %p362 = scmp.eq.s32.totalorder %s25, 3
      %p363 = scmp.ne.s32.totalorder %s358, %s360
      %p364 = scmp.eq.s32.totalorder %s25, 0
      %p365 = por %p363, %p364
      %p366 = scmp.ne.s32.totalorder %s358, %s360
      %p367 = scmp.eq.s32.totalorder %s30, 3
      %p368 = por %p366, %p367
      %p369 = scmp.ne.s32.totalorder %s360, %s361
      %p370 = scmp.eq.s32.totalorder %s30, 0
      %p371 = por %p369, %p370
      %p372 = scmp.ne.s32.totalorder %s360, %s361
      %p373 = scmp.eq.s32.totalorder %s31, 3
      %p374 = por %p372, %p373
      %p376 = scmp.ne.s32.totalorder %s361, %s375
      %p377 = scmp.eq.s32.totalorder %s31, 0
      %p378 = por %p376, %p377
      %s379 = ssub.s32 %s32, %s44
      %p380 = scmp.eq.s32.totalorder %s379, 0
      %s382 = sadd.s32 %s381, 1
      %s383 = scalar_select %p380, %s381, %s382
      %p386 = pneg %p380
      %p387 = scmp.eq.s32.totalorder %s25, 3
      %p388 = por %p386, %p387
      %p389 = scmp.ne.s32.totalorder %s381, %s384
      %p390 = scmp.eq.s32.totalorder %s25, 0
      %p391 = por %p389, %p390
      %p392 = scmp.ne.s32.totalorder %s381, %s384
      %p393 = scmp.eq.s32.totalorder %s30, 3
      %p394 = por %p392, %p393
      %p395 = scmp.ne.s32.totalorder %s384, %s385
      %p396 = scmp.eq.s32.totalorder %s30, 0
      %p397 = por %p395, %p396
      %p398 = scmp.ne.s32.totalorder %s384, %s385
      %p399 = scmp.eq.s32.totalorder %s31, 3
      %p400 = por %p398, %p399
      %p402 = scmp.ne.s32.totalorder %s385, %s401
      %p403 = scmp.eq.s32.totalorder %s31, 0
      %p404 = por %p402, %p403
      %p405 = scmp.le.s32.totalorder 1, %s25
      %p406 = scmp.lt.s32.totalorder %s25, 5
      %p407 = pnand %p405, %p406
      %p408 = pneg %p407
      // Predicated region
      $region9: #{tpu_custom_call.1} parent=5 // pred_check
        _
      $region10: #{tpu_custom_call.1} parent=5 // pred_check_branch
        %410 = sbr.rel (%p407) target = $region12
      $region11: #{tpu_custom_call.1} parent=5 // pred_region
        %s411 = ssub.s32 %s25, 1
        // Predicated region
        $region13: #{tpu_custom_call.1} parent=11 // pred_check
          %p412 = pneg %p84
        $region14: #{tpu_custom_call.1} parent=11 // pred_check_branch
          %414 = sbr.rel (%p412) target = $region16
        $region15: #{tpu_custom_call.1} parent=11 // pred_region
          %s416 = ssub.s32 1024, 1024
          %417 = vsyncadd [#allocation4], %s416
          %s418 = sshll.u32 [#allocation3], 4
          %s419 = int_to_ptr.vmem [resolvable:$true] %s418
          %424 = dma.hbm_to_vmem [thread:$0]  %s1, 1024, %s419, [#allocation4], 64, 64, 4
        $region16: #{tpu_custom_call.1} parent=11 // pred_fallthru
          _
        // Predicated region
        $region17: #{tpu_custom_call.1} parent=11 // pred_check
          %p425 = pneg %p105
        $region18: #{tpu_custom_call.1} parent=11 // pred_check_branch
          %427 = sbr.rel (%p425) target = $region20
        $region19: #{tpu_custom_call.1} parent=11 // pred_region
          %s429 = ssub.s32 16, 16
          %430 = vsyncadd [#allocation7], %s429
          %s432 = sshll.u32 [#allocation6], 4
          %s433 = int_to_ptr.vmem [resolvable:$true] %s432
          %435 = dma.hbm_to_vmem [thread:$0]  %s2, 16, %s433, [#allocation7]
        $region20: #{tpu_custom_call.1} parent=11 // pred_fallthru
          _
        // Predicated region
        $region21: #{tpu_custom_call.1} parent=11 // pred_check
          %p436 = pneg %p308
        $region22: #{tpu_custom_call.1} parent=11 // pred_check_branch
          %438 = sbr.rel (%p436) target = $region24
        $region23: #{tpu_custom_call.1} parent=11 // pred_region
          _
        $region24: #{tpu_custom_call.1} parent=11 // pred_fallthru
          _
        // Predicated region
        $region25: #{tpu_custom_call.1} parent=11 // pred_check
          %p439 = pneg %p329
        $region26: #{tpu_custom_call.1} parent=11 // pred_check_branch
          %441 = sbr.rel (%p439) target = $region28
        $region27: #{tpu_custom_call.1} parent=11 // pred_region
          _
        $region28: #{tpu_custom_call.1} parent=11 // pred_fallthru
          _
        // Predicated region
        $region29: #{tpu_custom_call.1} parent=11 // pred_check
          %p442 = pneg %p350
        $region30: #{tpu_custom_call.1} parent=11 // pred_check_branch
          %444 = sbr.rel (%p442) target = $region32
        $region31: #{tpu_custom_call.1} parent=11 // pred_region
          %s446 = ssub.s32 1024, 1024
          %447 = vsyncadd [#allocation7], %s446
          %s448 = sshll.u32 [#allocation11], 4
          %s449 = int_to_ptr.vmem [resolvable:$true] %s448
          %454 = dma.hbm_to_vmem [thread:$0]  %s12, 1024, %s449, [#allocation7], 64, 64, 4
        $region32: #{tpu_custom_call.1} parent=11 // pred_fallthru
          _
        // Predicated region
        $region33: #{tpu_custom_call.1} parent=11 // pred_check
          %p455 = pneg %p371
        $region34: #{tpu_custom_call.1} parent=11 // pred_check_branch
          %457 = sbr.rel (%p455) target = $region36
        $region35: #{tpu_custom_call.1} parent=11 // pred_region
          _
        $region36: #{tpu_custom_call.1} parent=11 // pred_fallthru
          _
      $region12: #{tpu_custom_call.1} parent=5 // pred_fallthru
        _
      %p458 = scmp.lt.s32.totalorder %s25, 4
      // Predicated region
      $region37: #{tpu_custom_call.1} parent=5 // pred_check
        %p459 = pneg %p458
      $region38: #{tpu_custom_call.1} parent=5 // pred_check_branch
        %461 = sbr.rel (%p459) target = $region40
      $region39: #{tpu_custom_call.1} parent=5 // pred_region
        // Predicated region
        $region41: #{tpu_custom_call.1} parent=39 // pred_check
          %p462 = pneg %p57
        $region42: #{tpu_custom_call.1} parent=39 // pred_check_branch
          %464 = sbr.rel (%p462) target = $region44
        $region43: #{tpu_custom_call.1} parent=39 // pred_region
          %p465 = scmp.lt.s32.totalorder %s32, 1
          %s466 = scalar_select %p465, %s32, 1
          %s467 = smul.addr %s466, 4
          %s468 = scalar_lea.vmem %s0, %s467
        $region44: #{tpu_custom_call.1} parent=39 // pred_fallthru
          _
        // Predicated region
        $region45: #{tpu_custom_call.1} parent=39 // pred_check
          %p469 = pneg %p125
        $region46: #{tpu_custom_call.1} parent=39 // pred_check_branch
          %471 = sbr.rel (%p469) target = $region48
        $region47: #{tpu_custom_call.1} parent=39 // pred_region
          %p472 = scmp.lt.s32.totalorder %s33, 1
          %s473 = scalar_select %p472, %s33, 1
          %s474 = smul.addr %s473, 8
          %s475 = scalar_lea.vmem %s3, %s474
        $region48: #{tpu_custom_call.1} parent=39 // pred_fallthru
          _
        // Predicated region
        $region49: #{tpu_custom_call.1} parent=39 // pred_check
          %p476 = pneg %p151
        $region50: #{tpu_custom_call.1} parent=39 // pred_check_branch
          %478 = sbr.rel (%p476) target = $region52
        $region51: #{tpu_custom_call.1} parent=39 // pred_region
          %p479 = scmp.lt.s32.totalorder %s33, 1
          %s480 = scalar_select %p479, %s33, 1
          %s481 = smul.addr %s480, 4
          %s482 = smul.addr %s481, 4
          %s483 = scalar_lea.vmem %s4, %s482
        $region52: #{tpu_custom_call.1} parent=39 // pred_fallthru
          _
        // Predicated region
        $region53: #{tpu_custom_call.1} parent=39 // pred_check
          %p484 = pneg %p177
        $region54: #{tpu_custom_call.1} parent=39 // pred_check_branch
          %486 = sbr.rel (%p484) target = $region56
        $region55: #{tpu_custom_call.1} parent=39 // pred_region
          %s487 = sand.u32 %s25, 1
          %s488 = scalar_lea.sflag [#allocation4], %s487
          %s489 = sand.u32 %s167, 1
          %s490 = smul.addr %s489, 4
          %s491 = scalar_lea.vmem [#allocation8], %s490
          %s493 = ssub.s32 64, 64
          %494 = vsyncadd %s488, %s493
          %s495 = smul.addr %s33, 64
          %s496 = scalar_lea.hbm %s5, %s495
          %s498 = sshll.u32 %s491, 4
          %s499 = int_to_ptr.vmem [resolvable:$true] %s498
          %501 = dma.hbm_to_vmem [thread:$0]  %s496, 64, %s499, %s488
        $region56: #{tpu_custom_call.1} parent=39 // pred_fallthru
          _
        // Predicated region
        $region57: #{tpu_custom_call.1} parent=39 // pred_check
          %p502 = pneg %p203
        $region58: #{tpu_custom_call.1} parent=39 // pred_check_branch
          %504 = sbr.rel (%p502) target = $region60
        $region59: #{tpu_custom_call.1} parent=39 // pred_region
          %p505 = scmp.lt.s32.totalorder %s33, 1
          %s506 = scalar_select %p505, %s33, 1
          %s507 = smul.addr %s506, 5
          %s508 = smul.addr %s507, 8
          %s509 = scalar_lea.vmem %s6, %s508
        $region60: #{tpu_custom_call.1} parent=39 // pred_fallthru
          _
        // Predicated region
        $region61: #{tpu_custom_call.1} parent=39 // pred_check
          %p510 = pneg %p229
        $region62: #{tpu_custom_call.1} parent=39 // pred_check_branch
          %512 = sbr.rel (%p510) target = $region64
        $region63: #{tpu_custom_call.1} parent=39 // pred_region
          %s513 = sand.u32 %s25, 1
          %s514 = scalar_lea.sflag [#allocation4], %s513
          %s515 = sand.u32 %s219, 1
          %s516 = smul.addr %s515, 64
          %s517 = scalar_lea.vmem [#allocation9], %s516
          %s519 = ssub.s32 1024, 1024
          %520 = vsyncadd %s514, %s519
          %s521 = smul.addr %s33, 16
          %s522 = smul.addr %s521, 64
          %s523 = scalar_lea.hbm %s7, %s522
          %s524 = sshll.u32 %s517, 4
          %s525 = int_to_ptr.vmem [resolvable:$true] %s524
          %530 = dma.hbm_to_vmem [thread:$0]  %s523, 1024, %s525, %s514, 64, 64, 4
        $region64: #{tpu_custom_call.1} parent=39 // pred_fallthru
          _
        // Predicated region
        $region65: #{tpu_custom_call.1} parent=39 // pred_check
          %p531 = pneg %p255
        $region66: #{tpu_custom_call.1} parent=39 // pred_check_branch
          %533 = sbr.rel (%p531) target = $region68
        $region67: #{tpu_custom_call.1} parent=39 // pred_region
          %p534 = scmp.lt.s32.totalorder %s33, 1
          %s535 = scalar_select %p534, %s33, 1
          %s536 = scalar_lea.vmem %s8, %s535
        $region68: #{tpu_custom_call.1} parent=39 // pred_fallthru
          _
        // Predicated region
        $region69: #{tpu_custom_call.1} parent=39 // pred_check
          %p537 = pneg %p281
        $region70: #{tpu_custom_call.1} parent=39 // pred_check_branch
          %539 = sbr.rel (%p537) target = $region72
        $region71: #{tpu_custom_call.1} parent=39 // pred_region
          %s540 = sand.u32 %s25, 1
          %s541 = scalar_lea.sflag [#allocation4], %s540
          %s542 = sand.u32 %s271, 1
          %s543 = smul.addr %s542, 64
          %s544 = scalar_lea.vmem [#allocation10], %s543
          %s546 = ssub.s32 1024, 1024
          %547 = vsyncadd %s541, %s546
          %s548 = smul.addr %s33, 16
          %s549 = smul.addr %s548, 64
          %s550 = scalar_lea.hbm %s9, %s549
          %s551 = sshll.u32 %s544, 4
          %s552 = int_to_ptr.vmem [resolvable:$true] %s551
          %557 = dma.hbm_to_vmem [thread:$0]  %s550, 1024, %s552, %s541, 64, 64, 4
        $region72: #{tpu_custom_call.1} parent=39 // pred_fallthru
          _
      $region40: #{tpu_custom_call.1} parent=5 // pred_fallthru
        _
      %p558 = scmp.le.s32.totalorder 1, %s25
      %p559 = scmp.lt.s32.totalorder %s25, 5
      %p560 = pnand %p558, %p559
      %p561 = pneg %p560
      // Predicated region
      $region73: #{tpu_custom_call.1} parent=5 // pred_check
        _
      $region74: #{tpu_custom_call.1} parent=5 // pred_check_branch
        %563 = sbr.rel (%p560) target = $region76
      $region75: #{tpu_custom_call.1} parent=5 // pred_region
        %s564 = ssub.s32 %s25, 1
        // Predicated region
        $region77: #{tpu_custom_call.1} parent=75 // pred_check
          %p565 = pneg %p84
        $region78: #{tpu_custom_call.1} parent=75 // pred_check_branch
          %567 = sbr.rel (%p565) target = $region80
        $region79: #{tpu_custom_call.1} parent=75 // pred_region
          %568 = dma.done [#allocation4], 1024
        $region80: #{tpu_custom_call.1} parent=75 // pred_fallthru
          _
        // Predicated region
        $region81: #{tpu_custom_call.1} parent=75 // pred_check
          %p569 = pneg %p105
        $region82: #{tpu_custom_call.1} parent=75 // pred_check_branch
          %571 = sbr.rel (%p569) target = $region84
        $region83: #{tpu_custom_call.1} parent=75 // pred_region
          %572 = dma.done [#allocation7], 16
        $region84: #{tpu_custom_call.1} parent=75 // pred_fallthru
          _
        %s573 = sand.u32 %s30, 1
        %s574 = scalar_lea.sflag [#allocation4], %s573
        %s575 = sand.u32 %s170, 1
        %s576 = smul.addr %s575, 4
        %s577 = scalar_lea.vmem [#allocation8], %s576
        // Predicated region
        $region85: #{tpu_custom_call.1} parent=75 // pred_check
          %p578 = pneg %p183
        $region86: #{tpu_custom_call.1} parent=75 // pred_check_branch
          %580 = sbr.rel (%p578) target = $region88
        $region87: #{tpu_custom_call.1} parent=75 // pred_region
          %581 = dma.done %s574, 64
        $region88: #{tpu_custom_call.1} parent=75 // pred_fallthru
          _
        %s582 = sand.u32 %s30, 1
        %s583 = scalar_lea.sflag [#allocation4], %s582
        %s584 = sand.u32 %s222, 1
        %s585 = smul.addr %s584, 64
        %s586 = scalar_lea.vmem [#allocation9], %s585
        // Predicated region
        $region89: #{tpu_custom_call.1} parent=75 // pred_check
          %p587 = pneg %p235
        $region90: #{tpu_custom_call.1} parent=75 // pred_check_branch
          %589 = sbr.rel (%p587) target = $region92
        $region91: #{tpu_custom_call.1} parent=75 // pred_region
          %590 = dma.done %s583, 1024
        $region92: #{tpu_custom_call.1} parent=75 // pred_fallthru
          _
        %s591 = sand.u32 %s30, 1
        %s592 = scalar_lea.sflag [#allocation4], %s591
        %s593 = sand.u32 %s274, 1
        %s594 = smul.addr %s593, 64
        %s595 = scalar_lea.vmem [#allocation10], %s594
        // Predicated region
        $region93: #{tpu_custom_call.1} parent=75 // pred_check
          %p596 = pneg %p287
        $region94: #{tpu_custom_call.1} parent=75 // pred_check_branch
          %598 = sbr.rel (%p596) target = $region96
        $region95: #{tpu_custom_call.1} parent=75 // pred_region
          %599 = dma.done %s592, 1024
        $region96: #{tpu_custom_call.1} parent=75 // pred_fallthru
          _
        // Predicated region
        $region97: #{tpu_custom_call.1} parent=75 // pred_check
          %p600 = pneg %p350
        $region98: #{tpu_custom_call.1} parent=75 // pred_check_branch
          %602 = sbr.rel (%p600) target = $region100
        $region99: #{tpu_custom_call.1} parent=75 // pred_region
          %603 = dma.done [#allocation7], 1024
        $region100: #{tpu_custom_call.1} parent=75 // pred_fallthru
          _
        %p604 = scmp.lt.s32.totalorder %s34, 1
        %s605 = scalar_select %p604, %s34, 1
        %s606 = smul.addr %s605, 4
        %s607 = scalar_lea.vmem %s0, %s606
        %p608 = pneg %p63
        %p609 = pneg %p60
        %p610 = pneg %p84
        %p611 = pneg %p81
        %p612 = pneg %p105
        %p613 = pneg %p102
        %p614 = scmp.lt.s32.totalorder %s35, 1
        %s615 = scalar_select %p614, %s35, 1
        %s616 = smul.addr %s615, 8
        %s617 = scalar_lea.vmem %s3, %s616
        %p618 = pneg %p131
        %p619 = pneg %p128
        %p620 = scmp.lt.s32.totalorder %s35, 1
        %s621 = scalar_select %p620, %s35, 1
        %s622 = smul.addr %s621, 4
        %s623 = smul.addr %s622, 4
        %s624 = scalar_lea.vmem %s4, %s623
        %p625 = pneg %p157
        %p626 = pneg %p154
        %s627 = sand.u32 %s30, 1
        %s628 = scalar_lea.sflag [#allocation4], %s627
        %s629 = sand.u32 %s170, 1
        %s630 = smul.addr %s629, 4
        %s631 = scalar_lea.vmem [#allocation8], %s630
        %p632 = pneg %p183
        %p633 = pneg %p180
        %p634 = scmp.lt.s32.totalorder %s35, 1
        %s635 = scalar_select %p634, %s35, 1
        %s636 = smul.addr %s635, 5
        %s637 = smul.addr %s636, 8
        %s638 = scalar_lea.vmem %s6, %s637
        %p639 = pneg %p209
        %p640 = pneg %p206
        %s641 = sand.u32 %s30, 1
        %s642 = scalar_lea.sflag [#allocation4], %s641
        %s643 = sand.u32 %s222, 1
        %s644 = smul.addr %s643, 64
        %s645 = scalar_lea.vmem [#allocation9], %s644
        %p646 = pneg %p235
        %p647 = pneg %p232
        %p648 = scmp.lt.s32.totalorder %s35, 1
        %s649 = scalar_select %p648, %s35, 1
        %s650 = scalar_lea.vmem %s8, %s649
        %p651 = pneg %p261
        %p652 = pneg %p258
        %s653 = sand.u32 %s30, 1
        %s654 = scalar_lea.sflag [#allocation4], %s653
        %s655 = sand.u32 %s274, 1
        %s656 = smul.addr %s655, 64
        %s657 = scalar_lea.vmem [#allocation10], %s656
        %p658 = pneg %p287
        %p659 = pneg %p284
        %p660 = pneg %p308
        %p661 = pneg %p305
        %p662 = pneg %p329
        %p663 = pneg %p326
        %p664 = pneg %p350
        %p665 = pneg %p347
        %p666 = pneg %p371
        %p667 = pneg %p368
        %p668 = pneg %p397
        %p669 = pneg %p394
        %s670 = sand.u32 %s384, 1
        %s671 = scalar_lea.sflag [#allocation5], %s670
        %s672 = sand.u32 %s384, 1
        %s673 = scalar_lea.vmem [#allocation12], %s672
        %p674 = scmp.lt.s32.totalorder %s34, 1
        %s675 = scalar_select %p674, %s34, 1
        %s676 = smul.addr %s675, 4
        %s677 = scalar_lea.vmem %s0, %s676
        %p678 = scmp.lt.s32.totalorder %s35, 1
        %s679 = scalar_select %p678, %s35, 1
        %s680 = smul.addr %s679, 8
        %s681 = scalar_lea.vmem %s3, %s680
        %p682 = scmp.lt.s32.totalorder %s35, 1
        %s683 = scalar_select %p682, %s35, 1
        %s684 = smul.addr %s683, 4
        %s685 = smul.addr %s684, 4
        %s686 = scalar_lea.vmem %s4, %s685
        %p687 = scmp.lt.s32.totalorder %s35, 1
        %s688 = scalar_select %p687, %s35, 1
        %s689 = smul.addr %s688, 5
        %s690 = smul.addr %s689, 8
        %s691 = scalar_lea.vmem %s6, %s690
        %p692 = scmp.lt.s32.totalorder %s35, 1
        %s693 = scalar_select %p692, %s35, 1
        %s694 = scalar_lea.vmem %s8, %s693
        %p696 = scmp.eq.s32.totalorder %s35, 0
        // Predicated region
        $region101: #{tpu_custom_call.1} parent=75 // pred_check
          %p697 = pneg %p696
        $region102: #{tpu_custom_call.1} parent=75 // pred_check_branch
          %699 = sbr.rel (%p697) target = $region104
        $region103: #{tpu_custom_call.1} parent=75 // pred_region
          %v700 = vld [vmem:[%s677] sm:$0xf]
          %v701 = vld [vmem:[#allocation3] sm:$0xf]
          %v702 = vld [vmem:[#allocation3 + $0x4] sm:$0xf]
          %v703 = vld [vmem:[#allocation3 + $0x8] sm:$0xf]
          %v704 = vld [vmem:[#allocation3 + $0xc] sm:$0xf]
          %v705 = vld [vmem:[#allocation3 + $0x10] sm:$0xf]
          %v706 = vld [vmem:[#allocation3 + $0x14] sm:$0xf]
          %v707 = vld [vmem:[#allocation3 + $0x18] sm:$0xf]
          %v708 = vld [vmem:[#allocation3 + $0x1c] sm:$0xf]
          %v709 = vld [vmem:[#allocation3 + $0x20] sm:$0xf]
          %v710 = vld [vmem:[#allocation3 + $0x24] sm:$0xf]
          %v711 = vld [vmem:[#allocation3 + $0x28] sm:$0xf]
          %v712 = vld [vmem:[#allocation3 + $0x2c] sm:$0xf]
          %v713 = vld [vmem:[#allocation3 + $0x30] sm:$0xf]
          %v714 = vld [vmem:[#allocation3 + $0x34] sm:$0xf]
          %v715 = vld [vmem:[#allocation3 + $0x38] sm:$0xf]
          %v716 = vld [vmem:[#allocation3 + $0x3c] sm:$0xf]
          %v717 = vld [vmem:[#allocation6] sm:$0x1]
          %v719 = vlaneseq
          %v720 = vshrl.u32 %v719, 7
          %v721 = vsub.s32 0, %v720
          %v722 = vrot.slane %v717, %v721
          %v740 = vunpack.c.l.b16 %v701
          %v741 = vunpack.c.l.b16 %v702
          %v742 = vunpack.c.l.b16 %v703
          %v743 = vunpack.c.l.b16 %v704
          %v744 = vunpack.c.l.b16 %v705
          %v745 = vunpack.c.l.b16 %v706
          %v746 = vunpack.c.l.b16 %v707
          %v747 = vunpack.c.l.b16 %v708
          %v748 = vunpack.c.l.b16 %v709
          %v749 = vunpack.c.l.b16 %v710
          %v750 = vunpack.c.l.b16 %v711
          %v751 = vunpack.c.l.b16 %v712
          %v752 = vunpack.c.l.b16 %v713
          %v753 = vunpack.c.l.b16 %v714
          %v754 = vunpack.c.l.b16 %v715
          %v755 = vunpack.c.l.b16 %v716
          %v756 = vpack.c.b16 %v741, %v740
          %v757 = vpack.c.b16 %v743, %v742
          %v758 = vpack.c.b16 %v745, %v744
          %v759 = vpack.c.b16 %v747, %v746
          %v760 = vpack.c.b16 %v749, %v748
          %v761 = vpack.c.b16 %v751, %v750
          %v762 = vpack.c.b16 %v753, %v752
          %v763 = vpack.c.b16 %v755, %v754
          %772 = vmatprep.subr.bf16.mxu0 0
          %773 = vmatpush1.bf16.msra.mxu0 %v756
          %774 = vmatprep.subr.bf16.mxu0 0
          %775 = vmatpush1.bf16.msra.mxu0 %v757
          %776 = vmatprep.subr.bf16.mxu0 0
          %777 = vmatpush1.bf16.msra.mxu0 %v758
          %778 = vmatprep.subr.bf16.mxu0 0
          %779 = vmatpush1.bf16.msra.mxu0 %v759
          %780 = vmatprep.subr.bf16.mxu0 0
          %781 = vmatpush1.bf16.msra.mxu0 %v760
          %782 = vmatprep.subr.bf16.mxu0 0
          %783 = vmatpush1.bf16.msra.mxu0 %v761
          %784 = vmatprep.subr.bf16.mxu0 0
          %785 = vmatpush1.bf16.msra.mxu0 %v762
          %786 = vmatprep.subr.bf16.mxu0 0
          %787 = vmatpush1.bf16.msra.mxu0 %v763
          %788 = vmatprep.subr.bf16.mxu0 0
          %789 = vmatpush1.bf16.msra.mxu0 0
          %790 = vmatprep.subr.bf16.mxu0 0
          %791 = vmatpush1.bf16.msra.mxu0 0
          %792 = vmatprep.subr.bf16.mxu0 0
          %793 = vmatpush1.bf16.msra.mxu0 0
          %794 = vmatprep.subr.bf16.mxu0 0
          %795 = vmatpush1.bf16.msra.mxu0 0
          %796 = vmatprep.subr.bf16.mxu0 0
          %797 = vmatpush1.bf16.msra.mxu0 0
          %798 = vmatprep.subr.bf16.mxu0 0
          %799 = vmatpush1.bf16.msra.mxu0 0
          %800 = vmatprep.subr.bf16.mxu0 0
          %801 = vmatpush1.bf16.msra.mxu0 0
          %802 = vmatprep.subr.bf16.mxu0 0
          %803 = vmatpush1.bf16.msra.mxu0 0
          %804 = vmatprep.mubr.bf16.mxu0 0
          %805 = vmatmul.mubr.bf16.gmra.mrb[0].mxu0 %v700
          %v806 = vpop.f32.mrb[0].mxu0
          %v807 = vadd.f32 %v722, %v806
          %v808 = vpop.f32.mrb[0].mxu0
          %v809 = vpop.f32.mrb[0].mxu0
          %v810 = vpop.f32.mrb[0].mxu0
          %811 = vdwg.mxu0
          %812 = vst [vmem:[#allocation2] sm:$0xff] %v807
        $region104: #{tpu_custom_call.1} parent=75 // pred_fallthru
          _
        %v813 = vld [vmem:[%s681] sm:$0x1f]
        %v814 = vld [vmem:[%s691] sm:$0xff]
        %v815 = vld [vmem:[%s691 + $0x8] sm:$0xff]
        %v816 = vld [vmem:[%s691 + $0x10] sm:$0xff]
        %v817 = vld [vmem:[%s691 + $0x18] sm:$0xff]
        %v818 = vld [vmem:[%s691 + $0x20] sm:$0xff]
        %v819 = vld [vmem:[%s686] sm:$0xf]
        %v820 = vld [vmem:[%s686 + $0x4] sm:$0xf]
        %v821 = vld [vmem:[%s686 + $0x8] sm:$0xf]
        %v822 = vld [vmem:[%s686 + $0xc] sm:$0xf]
        %v823 = vld [vmem:[%s577] sm:$0xf]
        %v824 = vld [vmem:[#allocation2] sm:$0xff]
        %825 = vadd.xlane.f32.xlu0 %v824
        %v826 = vpop.xlane.xlu0 %825
        %v827 = vmul.f32 %v826, 0.03125
        %v828 = vmul.f32 %v824, %v824
        %829 = vadd.xlane.f32.xlu0 %v828
        %v830 = vpop.xlane.xlu0 %829
        %v831 = vmul.f32 %v830, 0.03125
        %v832 = vmul.f32 %v827, %v827
        %v833 = vsub.f32 %v831, %v832
        %v834 = vmax.f32 %v833, 0.0
        %v835 = vsub.f32 %v824, %v827
        %v836 = vadd.f32 %v834, 1e-05
        %v837 = vrsqrt.pop %v836
        %v838 = vmul.f32 %v835, %v837
        %v839 = vlaneseq
        %v840 = vshrl.u32 %v839, 7
        %v841 = vsub.s32 0, %v840
        %v842 = vrot.slane %v813, %v841
        %v843 = vmul.f32 %v838, %v842
        %v844 = vlaneseq
        %v845 = vshrl.u32 %v844, 7
        %v846 = vsub.s32 1, %v845
        %v847 = vrot.slane %v813, %v846
        %v848 = vadd.f32 %v843, %v847
        %v849 = vpack.c.bf16 %v848, %v848
        %v854 = vunpack.c.l.b16 %v819
        %v855 = vunpack.c.l.b16 %v820
        %v856 = vunpack.c.l.b16 %v821
        %v857 = vunpack.c.l.b16 %v822
        %v858 = vpack.c.b16 %v855, %v854
        %v859 = vpack.c.b16 %v857, %v856
        %vm860 = vcmask 64512
        %v862 = vsel %vm860, %v858, 0
        %v865 = vsel %vm860, %v859, 0
        %vm867 = vcmask 1043456
        %v869 = vsel %vm867, %v849, 0
        %871 = vmatprep.subr.bf16.mxu0 0
        %872 = vmatpush1.bf16.msra.mxu0 %v869
        %873 = vmatprep.subr.bf16.mxu0 0
        %874 = vmatpush1.bf16.msra.mxu0 0
        %875 = vmatprep.subr.bf16.mxu0 0
        %876 = vmatpush1.bf16.msra.mxu0 0
        %877 = vmatprep.subr.bf16.mxu0 0
        %878 = vmatpush1.bf16.msra.mxu0 0
        %879 = vmatprep.subr.bf16.mxu0 0
        %880 = vmatpush1.bf16.msra.mxu0 0
        %881 = vmatprep.subr.bf16.mxu0 0
        %882 = vmatpush1.bf16.msra.mxu0 0
        %883 = vmatprep.subr.bf16.mxu0 0
        %884 = vmatpush1.bf16.msra.mxu0 0
        %885 = vmatprep.subr.bf16.mxu0 0
        %886 = vmatpush1.bf16.msra.mxu0 0
        %887 = vmatprep.subr.bf16.mxu0 0
        %888 = vmatpush1.bf16.msra.mxu0 0
        %889 = vmatprep.subr.bf16.mxu0 0
        %890 = vmatpush1.bf16.msra.mxu0 0
        %891 = vmatprep.subr.bf16.mxu0 0
        %892 = vmatpush1.bf16.msra.mxu0 0
        %893 = vmatprep.subr.bf16.mxu0 0
        %894 = vmatpush1.bf16.msra.mxu0 0
        %895 = vmatprep.subr.bf16.mxu0 0
        %896 = vmatpush1.bf16.msra.mxu0 0
        %897 = vmatprep.subr.bf16.mxu0 0
        %898 = vmatpush1.bf16.msra.mxu0 0
        %899 = vmatprep.subr.bf16.mxu0 0
        %900 = vmatpush1.bf16.msra.mxu0 0
        %901 = vmatprep.subr.bf16.mxu0 0
        %902 = vmatpush1.bf16.msra.mxu0 0
        %903 = vmatprep.mubr.bf16.mxu0 0
        %904 = vmatmul.mubr.bf16.gmra.mrb[0].mxu0 %v862
        %v905 = vpop.f32.mrb[0].mxu0
        %v906 = vadd.f32 %v814, %v905
        %v907 = vpop.f32.mrb[0].mxu0
        %v908 = vpop.f32.mrb[0].mxu0
        %v909 = vadd.f32 %v815, %v908
        %v910 = vpop.f32.mrb[0].mxu0
        %911 = vmatprep.mubr.bf16.mxu0 0
        %912 = vmatmul.mubr.bf16.gmra.mrb[0].mxu0 %v865
        %v913 = vpop.f32.mrb[0].mxu0
        %v914 = vadd.f32 %v816, %v913
        %v915 = vpop.f32.mrb[0].mxu0
        %v916 = vpop.f32.mrb[0].mxu0
        %v917 = vadd.f32 %v817, %v916
        %v918 = vpop.f32.mrb[0].mxu0
        %919 = vdwg.mxu0
        %v920 = vmul.f32 %v906, 0.5
        %v921 = vmul.f32 %v909, 0.5
        %v922 = vmul.f32 %v914, 0.5
        %v923 = vmul.f32 %v917, 0.5
        %v924 = vmul.f32 %v906, 0.044715
        %v925 = vmul.f32 %v909, 0.044715
        %v926 = vmul.f32 %v914, 0.044715
        %v927 = vmul.f32 %v917, 0.044715
        %v928 = vmul.f32 %v924, %v906
        %v929 = vmul.f32 %v925, %v909
        %v930 = vmul.f32 %v926, %v914
        %v931 = vmul.f32 %v927, %v917
        %v932 = vmul.f32 %v928, %v906
        %v933 = vmul.f32 %v929, %v909
        %v934 = vmul.f32 %v930, %v914
        %v935 = vmul.f32 %v931, %v917
        %v936 = vadd.f32 %v906, %v932
        %v937 = vadd.f32 %v909, %v933
        %v938 = vadd.f32 %v914, %v934
        %v939 = vadd.f32 %v917, %v935
        %v940 = vmul.f32 %v936, 0.7978846
        %v941 = vmul.f32 %v937, 0.7978846
        %v942 = vmul.f32 %v938, 0.7978846
        %v943 = vmul.f32 %v939, 0.7978846
        %v944 = vtanh.pop %v940
        %v945 = vtanh.pop %v941
        %v946 = vtanh.pop %v942
        %v947 = vtanh.pop %v943
        %v948 = vadd.f32 %v944, 1.0
        %v949 = vadd.f32 %v945, 1.0
        %v950 = vadd.f32 %v946, 1.0
        %v951 = vadd.f32 %v947, 1.0
        %v952 = vmul.f32 %v920, %v948
        %v953 = vmul.f32 %v921, %v949
        %v954 = vmul.f32 %v922, %v950
        %v955 = vmul.f32 %v923, %v951
        %v956 = vpack.c.bf16 %v953, %v952
        %v957 = vpack.c.bf16 %v955, %v954
        %vm958 = vcmask 261120
        %v960 = vsel %vm958, %v823, 0
        %962 = vmatprep.subr.bf16.mxu0 0
        %963 = vmatpush1.bf16.msra.mxu0 %v956
        %964 = vmatprep.subr.bf16.mxu0 0
        %965 = vmatpush1.bf16.msra.mxu0 %v957
        %966 = vmatprep.subr.bf16.mxu0 0
        %967 = vmatpush1.bf16.msra.mxu0 0
        %968 = vmatprep.subr.bf16.mxu0 0
        %969 = vmatpush1.bf16.msra.mxu0 0
        %970 = vmatprep.subr.bf16.mxu0 0
        %971 = vmatpush1.bf16.msra.mxu0 0
        %972 = vmatprep.subr.bf16.mxu0 0
        %973 = vmatpush1.bf16.msra.mxu0 0
        %974 = vmatprep.subr.bf16.mxu0 0
        %975 = vmatpush1.bf16.msra.mxu0 0
        %976 = vmatprep.subr.bf16.mxu0 0
        %977 = vmatpush1.bf16.msra.mxu0 0
        %978 = vmatprep.subr.bf16.mxu0 0
        %979 = vmatpush1.bf16.msra.mxu0 0
        %980 = vmatprep.subr.bf16.mxu0 0
        %981 = vmatpush1.bf16.msra.mxu0 0
        %982 = vmatprep.subr.bf16.mxu0 0
        %983 = vmatpush1.bf16.msra.mxu0 0
        %984 = vmatprep.subr.bf16.mxu0 0
        %985 = vmatpush1.bf16.msra.mxu0 0
        %986 = vmatprep.subr.bf16.mxu0 0
        %987 = vmatpush1.bf16.msra.mxu0 0
        %988 = vmatprep.subr.bf16.mxu0 0
        %989 = vmatpush1.bf16.msra.mxu0 0
        %990 = vmatprep.subr.bf16.mxu0 0
        %991 = vmatpush1.bf16.msra.mxu0 0
        %992 = vmatprep.subr.bf16.mxu0 0
        %993 = vmatpush1.bf16.msra.mxu0 0
        %994 = vmatprep.mubr.bf16.mxu0 0
        %995 = vmatmul.mubr.bf16.gmra.mrb[0].mxu0 %v960
        %v996 = vpop.f32.mrb[0].mxu0
        %v997 = vadd.f32 %v818, %v996
        %v998 = vpop.f32.mrb[0].mxu0
        %v999 = vpop.f32.mrb[0].mxu0
        %v1000 = vpop.f32.mrb[0].mxu0
        %1001 = vdwg.mxu0
        %v1002 = vadd.f32 %v824, %v997
        %1003 = vst [vmem:[#allocation2] sm:$0xff] %v1002
        %v1004 = vld [vmem:[#allocation2] sm:$0xff]
        %1005 = vadd.xlane.f32.xlu0 %v1004
        %v1006 = vpop.xlane.xlu0 %1005
        %v1007 = vmul.f32 %v1006, 0.03125
        %v1008 = vmul.f32 %v1004, %v1004
        %1009 = vadd.xlane.f32.xlu0 %v1008
        %v1010 = vpop.xlane.xlu0 %1009
        %v1011 = vmul.f32 %v1010, 0.03125
        %v1012 = vmul.f32 %v1007, %v1007
        %v1013 = vsub.f32 %v1011, %v1012
        %v1014 = vmax.f32 %v1013, 0.0
        %v1015 = vsub.f32 %v1004, %v1007
        %v1016 = vadd.f32 %v1014, 1e-05
        %v1017 = vrsqrt.pop %v1016
        %v1018 = vmul.f32 %v1015, %v1017
        %v1019 = vlaneseq
        %v1020 = vshrl.u32 %v1019, 7
        %v1021 = vsub.s32 2, %v1020
        %v1022 = vrot.slane %v813, %v1021
        %v1023 = vmul.f32 %v1018, %v1022
        %v1024 = vlaneseq
        %v1025 = vshrl.u32 %v1024, 7
        %v1026 = vsub.s32 3, %v1025
        %v1027 = vrot.slane %v813, %v1026
        %v1028 = vadd.f32 %v1023, %v1027
        %v1029 = vpack.c.bf16 %v1028, %v1028
        %v1030 = vld [vmem:[%s586] sm:$0xf]
        %v1031 = vld [vmem:[%s586 + $0x4] sm:$0xf]
        %v1032 = vld [vmem:[%s586 + $0x8] sm:$0xf]
        %v1033 = vld [vmem:[%s586 + $0xc] sm:$0xf]
        %v1034 = vld [vmem:[%s586 + $0x10] sm:$0xf]
        %v1035 = vld [vmem:[%s586 + $0x14] sm:$0xf]
        %v1036 = vld [vmem:[%s586 + $0x18] sm:$0xf]
        %v1037 = vld [vmem:[%s586 + $0x1c] sm:$0xf]
        %v1038 = vld [vmem:[%s586 + $0x20] sm:$0xf]
        %v1039 = vld [vmem:[%s586 + $0x24] sm:$0xf]
        %v1040 = vld [vmem:[%s586 + $0x28] sm:$0xf]
        %v1041 = vld [vmem:[%s586 + $0x2c] sm:$0xf]
        %v1042 = vld [vmem:[%s586 + $0x30] sm:$0xf]
        %v1043 = vld [vmem:[%s586 + $0x34] sm:$0xf]
        %v1044 = vld [vmem:[%s586 + $0x38] sm:$0xf]
        %v1045 = vld [vmem:[%s586 + $0x3c] sm:$0xf]
        %v1046 = vld [vmem:[%s694] sm:$0x1]
        %v1048 = vlaneseq
        %v1049 = vshrl.u32 %v1048, 7
        %v1050 = vsub.s32 0, %v1049
        %v1051 = vrot.slane %v1046, %v1050
        %v1069 = vunpack.c.l.b16 %v1030
        %v1070 = vunpack.c.l.b16 %v1031
        %v1071 = vunpack.c.l.b16 %v1032
        %v1072 = vunpack.c.l.b16 %v1033
        %v1073 = vunpack.c.l.b16 %v1034
        %v1074 = vunpack.c.l.b16 %v1035
        %v1075 = vunpack.c.l.b16 %v1036
        %v1076 = vunpack.c.l.b16 %v1037
        %v1077 = vunpack.c.l.b16 %v1038
        %v1078 = vunpack.c.l.b16 %v1039
        %v1079 = vunpack.c.l.b16 %v1040
        %v1080 = vunpack.c.l.b16 %v1041
        %v1081 = vunpack.c.l.b16 %v1042
        %v1082 = vunpack.c.l.b16 %v1043
        %v1083 = vunpack.c.l.b16 %v1044
        %v1084 = vunpack.c.l.b16 %v1045
        %v1085 = vpack.c.b16 %v1070, %v1069
        %v1086 = vpack.c.b16 %v1072, %v1071
        %v1087 = vpack.c.b16 %v1074, %v1073
        %v1088 = vpack.c.b16 %v1076, %v1075
        %v1089 = vpack.c.b16 %v1078, %v1077
        %v1090 = vpack.c.b16 %v1080, %v1079
        %v1091 = vpack.c.b16 %v1082, %v1081
        %v1092 = vpack.c.b16 %v1084, %v1083
        %1101 = vmatprep.subr.bf16.mxu0 0
        %1102 = vmatpush1.bf16.msra.mxu0 %v1085
        %1103 = vmatprep.subr.bf16.mxu0 0
        %1104 = vmatpush1.bf16.msra.mxu0 %v1086
        %1105 = vmatprep.subr.bf16.mxu0 0
        %1106 = vmatpush1.bf16.msra.mxu0 %v1087
        %1107 = vmatprep.subr.bf16.mxu0 0
        %1108 = vmatpush1.bf16.msra.mxu0 %v1088
        %1109 = vmatprep.subr.bf16.mxu0 0
        %1110 = vmatpush1.bf16.msra.mxu0 %v1089
        %1111 = vmatprep.subr.bf16.mxu0 0
        %1112 = vmatpush1.bf16.msra.mxu0 %v1090
        %1113 = vmatprep.subr.bf16.mxu0 0
        %1114 = vmatpush1.bf16.msra.mxu0 %v1091
        %1115 = vmatprep.subr.bf16.mxu0 0
        %1116 = vmatpush1.bf16.msra.mxu0 %v1092
        %1117 = vmatprep.subr.bf16.mxu0 0
        %1118 = vmatpush1.bf16.msra.mxu0 0
        %1119 = vmatprep.subr.bf16.mxu0 0
        %1120 = vmatpush1.bf16.msra.mxu0 0
        %1121 = vmatprep.subr.bf16.mxu0 0
        %1122 = vmatpush1.bf16.msra.mxu0 0
        %1123 = vmatprep.subr.bf16.mxu0 0
        %1124 = vmatpush1.bf16.msra.mxu0 0
        %1125 = vmatprep.subr.bf16.mxu0 0
        %1126 = vmatpush1.bf16.msra.mxu0 0
        %1127 = vmatprep.subr.bf16.mxu0 0
        %1128 = vmatpush1.bf16.msra.mxu0 0
        %1129 = vmatprep.subr.bf16.mxu0 0
        %1130 = vmatpush1.bf16.msra.mxu0 0
        %1131 = vmatprep.subr.bf16.mxu0 0
        %1132 = vmatpush1.bf16.msra.mxu0 0
        %1133 = vmatprep.mubr.bf16.mxu0 0
        %1134 = vmatmul.mubr.bf16.gmra.mrb[0].mxu0 %v1029
        %v1135 = vpop.f32.mrb[0].mxu0
        %v1136 = vadd.f32 %v1051, %v1135
        %v1137 = vpop.f32.mrb[0].mxu0
        %v1138 = vpop.f32.mrb[0].mxu0
        %v1139 = vpop.f32.mrb[0].mxu0
        %1140 = vdwg.mxu0
        %v1141 = vmul.f32 %v1136, 0.5
        %v1142 = vmul.f32 %v1136, 0.044715
        %v1143 = vmul.f32 %v1142, %v1136
        %v1144 = vmul.f32 %v1143, %v1136
        %v1145 = vadd.f32 %v1136, %v1144
        %v1146 = vmul.f32 %v1145, 0.7978846
        %v1147 = vtanh.pop %v1146
        %v1148 = vadd.f32 %v1147, 1.0
        %v1149 = vmul.f32 %v1141, %v1148
        %v1150 = vpack.c.bf16 %v1149, %v1149
        %v1151 = vld [vmem:[%s595] sm:$0xf]
        %v1152 = vld [vmem:[%s595 + $0x4] sm:$0xf]
        %v1153 = vld [vmem:[%s595 + $0x8] sm:$0xf]
        %v1154 = vld [vmem:[%s595 + $0xc] sm:$0xf]
        %v1155 = vld [vmem:[%s595 + $0x10] sm:$0xf]
        %v1156 = vld [vmem:[%s595 + $0x14] sm:$0xf]
        %v1157 = vld [vmem:[%s595 + $0x18] sm:$0xf]
        %v1158 = vld [vmem:[%s595 + $0x1c] sm:$0xf]
        %v1159 = vld [vmem:[%s595 + $0x20] sm:$0xf]
        %v1160 = vld [vmem:[%s595 + $0x24] sm:$0xf]
        %v1161 = vld [vmem:[%s595 + $0x28] sm:$0xf]
        %v1162 = vld [vmem:[%s595 + $0x2c] sm:$0xf]
        %v1163 = vld [vmem:[%s595 + $0x30] sm:$0xf]
        %v1164 = vld [vmem:[%s595 + $0x34] sm:$0xf]
        %v1165 = vld [vmem:[%s595 + $0x38] sm:$0xf]
        %v1166 = vld [vmem:[%s595 + $0x3c] sm:$0xf]
        %v1167 = vlaneseq
        %v1168 = vshrl.u32 %v1167, 7
        %v1169 = vsub.s32 4, %v1168
        %v1170 = vrot.slane %v813, %v1169
        %v1187 = vunpack.c.l.b16 %v1151
        %v1188 = vunpack.c.l.b16 %v1152
        %v1189 = vunpack.c.l.b16 %v1153
        %v1190 = vunpack.c.l.b16 %v1154
        %v1191 = vunpack.c.l.b16 %v1155
        %v1192 = vunpack.c.l.b16 %v1156
        %v1193 = vunpack.c.l.b16 %v1157
        %v1194 = vunpack.c.l.b16 %v1158
        %v1195 = vunpack.c.l.b16 %v1159
        %v1196 = vunpack.c.l.b16 %v1160
        %v1197 = vunpack.c.l.b16 %v1161
        %v1198 = vunpack.c.l.b16 %v1162
        %v1199 = vunpack.c.l.b16 %v1163
        %v1200 = vunpack.c.l.b16 %v1164
        %v1201 = vunpack.c.l.b16 %v1165
        %v1202 = vunpack.c.l.b16 %v1166
        %v1203 = vpack.c.b16 %v1188, %v1187
        %v1204 = vpack.c.b16 %v1190, %v1189
        %v1205 = vpack.c.b16 %v1192, %v1191
        %v1206 = vpack.c.b16 %v1194, %v1193
        %v1207 = vpack.c.b16 %v1196, %v1195
        %v1208 = vpack.c.b16 %v1198, %v1197
        %v1209 = vpack.c.b16 %v1200, %v1199
        %v1210 = vpack.c.b16 %v1202, %v1201
        %1219 = vmatprep.subr.bf16.mxu0 0
        %1220 = vmatpush1.bf16.msra.mxu0 %v1203
        %1221 = vmatprep.subr.bf16.mxu0 0
        %1222 = vmatpush1.bf16.msra.mxu0 %v1204
        %1223 = vmatprep.subr.bf16.mxu0 0
        %1224 = vmatpush1.bf16.msra.mxu0 %v1205
        %1225 = vmatprep.subr.bf16.mxu0 0
        %1226 = vmatpush1.bf16.msra.mxu0 %v1206
        %1227 = vmatprep.subr.bf16.mxu0 0
        %1228 = vmatpush1.bf16.msra.mxu0 %v1207
        %1229 = vmatprep.subr.bf16.mxu0 0
        %1230 = vmatpush1.bf16.msra.mxu0 %v1208
        %1231 = vmatprep.subr.bf16.mxu0 0
        %1232 = vmatpush1.bf16.msra.mxu0 %v1209
        %1233 = vmatprep.subr.bf16.mxu0 0
        %1234 = vmatpush1.bf16.msra.mxu0 %v1210
        %1235 = vmatprep.subr.bf16.mxu0 0
        %1236 = vmatpush1.bf16.msra.mxu0 0
        %1237 = vmatprep.subr.bf16.mxu0 0
        %1238 = vmatpush1.bf16.msra.mxu0 0
        %1239 = vmatprep.subr.bf16.mxu0 0
        %1240 = vmatpush1.bf16.msra.mxu0 0
        %1241 = vmatprep.subr.bf16.mxu0 0
        %1242 = vmatpush1.bf16.msra.mxu0 0
        %1243 = vmatprep.subr.bf16.mxu0 0
        %1244 = vmatpush1.bf16.msra.mxu0 0
        %1245 = vmatprep.subr.bf16.mxu0 0
        %1246 = vmatpush1.bf16.msra.mxu0 0
        %1247 = vmatprep.subr.bf16.mxu0 0
        %1248 = vmatpush1.bf16.msra.mxu0 0
        %1249 = vmatprep.subr.bf16.mxu0 0
        %1250 = vmatpush1.bf16.msra.mxu0 0
        %1251 = vmatprep.mubr.bf16.mxu0 0
        %1252 = vmatmul.mubr.bf16.gmra.mrb[0].mxu0 %v1150
        %v1253 = vpop.f32.mrb[0].mxu0
        %v1254 = vadd.f32 %v1170, %v1253
        %v1255 = vpop.f32.mrb[0].mxu0
        %v1256 = vpop.f32.mrb[0].mxu0
        %v1257 = vpop.f32.mrb[0].mxu0
        %1258 = vdwg.mxu0
        %v1259 = vadd.f32 %v1004, %v1254
        %1260 = vst [vmem:[#allocation2] sm:$0xff] %v1259
        %p1261 = scmp.eq.s32.totalorder %s35, 1
        // Predicated region
        $region105: #{tpu_custom_call.1} parent=75 // pred_check
          %p1262 = pneg %p1261
        $region106: #{tpu_custom_call.1} parent=75 // pred_check_branch
          %1264 = sbr.rel (%p1262) target = $region108
        $region107: #{tpu_custom_call.1} parent=75 // pred_region
          %v1265 = vld [vmem:[#allocation2] sm:$0xff]
          %v1266 = vld [vmem:[%s10] sm:$0x1]
          %v1267 = vld [vmem:[%s11] sm:$0x1]
          %1268 = vadd.xlane.f32.xlu0 %v1265
          %v1269 = vpop.xlane.xlu0 %1268
          %v1270 = vmul.f32 %v1269, 0.03125
          %v1271 = vmul.f32 %v1265, %v1265
          %1272 = vadd.xlane.f32.xlu0 %v1271
          %v1273 = vpop.xlane.xlu0 %1272
          %v1274 = vmul.f32 %v1273, 0.03125
          %v1275 = vmul.f32 %v1270, %v1270
          %v1276 = vsub.f32 %v1274, %v1275
          %v1277 = vmax.f32 %v1276, 0.0
          %v1278 = vsub.f32 %v1265, %v1270
          %v1279 = vadd.f32 %v1277, 1e-05
          %v1280 = vrsqrt.pop %v1279
          %v1281 = vmul.f32 %v1278, %v1280
          %v1283 = vlaneseq
          %v1284 = vshrl.u32 %v1283, 7
          %v1285 = vsub.s32 0, %v1284
          %v1286 = vrot.slane %v1266, %v1285
          %v1288 = vmul.f32 %v1281, %v1286
          %v1290 = vlaneseq
          %v1291 = vshrl.u32 %v1290, 7
          %v1292 = vsub.s32 0, %v1291
          %v1293 = vrot.slane %v1267, %v1292
          %v1295 = vadd.f32 %v1288, %v1293
          %v1296 = vrot.slane %v1295, 4
          %v1297 = vadd.f32 %v1295, %v1296
          %v1298 = vrot.slane %v1297, 2
          %v1299 = vadd.f32 %v1297, %v1298
          %v1300 = vrot.slane %v1299, 1
          %v1301 = vadd.f32 %v1299, %v1300
          %v1302 = vmul.f32 %v1301, 0.125
          %v1303 = vpack.c.bf16 %v1302, %v1302
          %v1304 = vld [vmem:[#allocation11] sm:$0xf]
          %v1305 = vld [vmem:[#allocation11 + $0x4] sm:$0xf]
          %v1306 = vld [vmem:[#allocation11 + $0x8] sm:$0xf]
          %v1307 = vld [vmem:[#allocation11 + $0xc] sm:$0xf]
          %v1308 = vld [vmem:[#allocation11 + $0x10] sm:$0xf]
          %v1309 = vld [vmem:[#allocation11 + $0x14] sm:$0xf]
          %v1310 = vld [vmem:[#allocation11 + $0x18] sm:$0xf]
          %v1311 = vld [vmem:[#allocation11 + $0x1c] sm:$0xf]
          %v1312 = vld [vmem:[#allocation11 + $0x20] sm:$0xf]
          %v1313 = vld [vmem:[#allocation11 + $0x24] sm:$0xf]
          %v1314 = vld [vmem:[#allocation11 + $0x28] sm:$0xf]
          %v1315 = vld [vmem:[#allocation11 + $0x2c] sm:$0xf]
          %v1316 = vld [vmem:[#allocation11 + $0x30] sm:$0xf]
          %v1317 = vld [vmem:[#allocation11 + $0x34] sm:$0xf]
          %v1318 = vld [vmem:[#allocation11 + $0x38] sm:$0xf]
          %v1319 = vld [vmem:[#allocation11 + $0x3c] sm:$0xf]
          %v1320 = vld [vmem:[%s13] sm:$0x1]
          %v1337 = vunpack.c.l.b16 %v1304
          %v1338 = vunpack.c.l.b16 %v1305
          %v1339 = vunpack.c.l.b16 %v1306
          %v1340 = vunpack.c.l.b16 %v1307
          %v1341 = vunpack.c.l.b16 %v1308
          %v1342 = vunpack.c.l.b16 %v1309
          %v1343 = vunpack.c.l.b16 %v1310
          %v1344 = vunpack.c.l.b16 %v1311
          %v1345 = vunpack.c.l.b16 %v1312
          %v1346 = vunpack.c.l.b16 %v1313
          %v1347 = vunpack.c.l.b16 %v1314
          %v1348 = vunpack.c.l.b16 %v1315
          %v1349 = vunpack.c.l.b16 %v1316
          %v1350 = vunpack.c.l.b16 %v1317
          %v1351 = vunpack.c.l.b16 %v1318
          %v1352 = vunpack.c.l.b16 %v1319
          %v1353 = vpack.c.b16 %v1338, %v1337
          %v1354 = vpack.c.b16 %v1340, %v1339
          %v1355 = vpack.c.b16 %v1342, %v1341
          %v1356 = vpack.c.b16 %v1344, %v1343
          %v1357 = vpack.c.b16 %v1346, %v1345
          %v1358 = vpack.c.b16 %v1348, %v1347
          %v1359 = vpack.c.b16 %v1350, %v1349
          %v1360 = vpack.c.b16 %v1352, %v1351
          %1369 = vmatprep.subr.bf16.mxu0 0
          %1370 = vmatpush1.bf16.msra.mxu0 %v1353
          %1371 = vmatprep.subr.bf16.mxu0 0
          %1372 = vmatpush1.bf16.msra.mxu0 %v1354
          %1373 = vmatprep.subr.bf16.mxu0 0
          %1374 = vmatpush1.bf16.msra.mxu0 %v1355
          %1375 = vmatprep.subr.bf16.mxu0 0
          %1376 = vmatpush1.bf16.msra.mxu0 %v1356
          %1377 = vmatprep.subr.bf16.mxu0 0
          %1378 = vmatpush1.bf16.msra.mxu0 %v1357
          %1379 = vmatprep.subr.bf16.mxu0 0
          %1380 = vmatpush1.bf16.msra.mxu0 %v1358
          %1381 = vmatprep.subr.bf16.mxu0 0
          %1382 = vmatpush1.bf16.msra.mxu0 %v1359
          %1383 = vmatprep.subr.bf16.mxu0 0
          %1384 = vmatpush1.bf16.msra.mxu0 %v1360
          %1385 = vmatprep.subr.bf16.mxu0 0
          %1386 = vmatpush1.bf16.msra.mxu0 0
          %1387 = vmatprep.subr.bf16.mxu0 0
          %1388 = vmatpush1.bf16.msra.mxu0 0
          %1389 = vmatprep.subr.bf16.mxu0 0
          %1390 = vmatpush1.bf16.msra.mxu0 0
          %1391 = vmatprep.subr.bf16.mxu0 0
          %1392 = vmatpush1.bf16.msra.mxu0 0
          %1393 = vmatprep.subr.bf16.mxu0 0
          %1394 = vmatpush1.bf16.msra.mxu0 0
          %1395 = vmatprep.subr.bf16.mxu0 0
          %1396 = vmatpush1.bf16.msra.mxu0 0
          %1397 = vmatprep.subr.bf16.mxu0 0
          %1398 = vmatpush1.bf16.msra.mxu0 0
          %1399 = vmatprep.subr.bf16.mxu0 0
          %1400 = vmatpush1.bf16.msra.mxu0 0
          %1401 = vmatprep.mubr.bf16.mxu0 0
          %1402 = vmatmul.mubr.bf16.gmra.mrb[0].mxu0 %v1303
          %v1403 = vpop.f32.mrb[0].mxu0
          %v1404 = vadd.f32 %v1320, %v1403
          %v1405 = vpop.f32.mrb[0].mxu0
          %v1406 = vpop.f32.mrb[0].mxu0
          %v1407 = vpop.f32.mrb[0].mxu0
          %1408 = vdwg.mxu0
          %1409 = vst [vmem:[%s673] sm:$0x1] %v1404
        $region108: #{tpu_custom_call.1} parent=75 // pred_fallthru
          _
        %s1410 = sand.u32 %s384, 1
        %s1411 = scalar_lea.sflag [#allocation5], %s1410
        %s1412 = sand.u32 %s384, 1
        %s1413 = scalar_lea.vmem [#allocation12], %s1412
        // Predicated region
        $region109: #{tpu_custom_call.1} parent=75 // pred_check
          %p1414 = pneg %p394
        $region110: #{tpu_custom_call.1} parent=75 // pred_check_branch
          %1416 = sbr.rel (%p1414) target = $region112
        $region111: #{tpu_custom_call.1} parent=75 // pred_region
          %s1418 = ssub.s32 16, 16
          %1419 = vsyncadd %s1411, %s1418
          %s1420 = smul.addr %s34, 16
          %s1421 = scalar_lea.hbm %s14, %s1420
          %s1423 = sshll.u32 %s1413, 4
          %s1424 = int_to_ptr.vmem [resolvable:$true] %s1423
          %1426 = dma.vmem_to_hbm [thread:$0]  %s1424, 16, %s1421, %s1411
        $region112: #{tpu_custom_call.1} parent=75 // pred_fallthru
          _
      $region76: #{tpu_custom_call.1} parent=5 // pred_fallthru
        _
      %p1427 = scmp.le.s32.totalorder 2, %s25
      // Predicated region
      $region113: #{tpu_custom_call.1} parent=5 // pred_check
        %p1428 = pneg %p1427
      $region114: #{tpu_custom_call.1} parent=5 // pred_check_branch
        %1430 = sbr.rel (%p1428) target = $region116
      $region115: #{tpu_custom_call.1} parent=5 // pred_region
        %s1431 = ssub.s32 %s25, 2
        // Predicated region
        $region117: #{tpu_custom_call.1} parent=115 // pred_check
          %p1432 = pneg %p400
        $region118: #{tpu_custom_call.1} parent=115 // pred_check_branch
          %1434 = sbr.rel (%p1432) target = $region120
        $region119: #{tpu_custom_call.1} parent=115 // pred_region
          %s1435 = sand.u32 %s385, 1
          %s1436 = scalar_lea.sflag [#allocation5], %s1435
          %s1437 = sand.u32 %s385, 1
          %s1438 = scalar_lea.vmem [#allocation12], %s1437
          %1439 = dma.done %s1436, 16
        $region120: #{tpu_custom_call.1} parent=115 // pred_fallthru
          _
      $region116: #{tpu_custom_call.1} parent=5 // pred_fallthru
        _
    $region6: #{tpu_custom_call.1} parent=1 // loop_footer
      %s29 = sadd.s32 1, %s25
    $region7: #{tpu_custom_call.1} parent=1 // loop_footer_branch
      %24 = sbr.rel target = $region3
    $region8: #{tpu_custom_call.1} parent=1 // loop_exit
      _
    %1440 = vsyncpa [#allocation4], 1
    %s1441 = scalar_lea.sflag [#allocation4], 1
    %1442 = vsyncpa %s1441, 1
    %1443 = vsyncpa [#allocation7], 1
    %1444 = vsyncpa [#allocation5], 1
    %s1445 = scalar_lea.sflag [#allocation5], 1
    %1446 = vsyncpa %s1445, 1

</llo_original>
